<compile_context>
chip_gen: v6e
topology: v6e:2x2x1
jax: 0.10.0
libtpu: 0.0.40
codegen_flags: <defaults>
</compile_context>

<pallas_src>
import functools
import math

import jax
import jax.numpy as jnp
from jax.experimental import pallas as pl
from jax.experimental.pallas import tpu as pltpu


# ----------------------------------------------------------------------------
# Pallas kernel: fused softmax_kernel feature maps + linear attention
# ----------------------------------------------------------------------------
def _fast_attention_kernel(qk_ref, v_ref, projT_ref, o_ref, *,
                           nb_features, d_true, eps):
    """One grid step processes `hpb` heads.

    qk_ref    : (2, hpb, n, d_pad)  stacked queries/keys (unscaled, zero-padded)
    v_ref     : (hpb, n, d_pad)     values (zero-padded)
    projT_ref : (d_pad, m_pad)      data_normalizer * projection^T, zero-padded
    o_ref     : (hpb, n, d_pad)     output (padded head dim)
    """
    _, hpb, n, d_pad = qk_ref.shape
    m_pad = projT_ref.shape[1]
    rows = hpb * n

    data_norm = d_true ** (-0.25)          # normalize_data=True (true head dim)
    ratio = nb_features ** (-0.5)          # true (unpadded) feature count

    qk = qk_ref[...].astype(jnp.float32).reshape(2 * rows, d_pad)
    v3 = v_ref[...].astype(jnp.float32)
    pT = projT_ref[...]                    # data_norm already folded in

    # --- one fused, lane-dense MXU pass for BOTH q and k projections ---------
    # f32 operands / f32 accumulation: the exp() downstream amplifies rounding.
    qkd = jnp.dot(qk, pT, preferred_element_type=jnp.float32)    # (2*rows, m_pad)

    # diag term of the softmax kernel (padded columns are zero -> no effect)
    diag = 0.5 * (data_norm ** 2) * jnp.sum(qk * qk, axis=-1, keepdims=True)

    # Padded feature lanes (>= nb_features): push to -1e30 so exp() -> exactly
    # 0 in k' and so they never win the per-row max of q'.
    lane = jax.lax.broadcasted_iota(jnp.int32, (1, m_pad), 1)
    qkd = qkd + jnp.where(lane < nb_features, 0.0, -1e30)

    qd, dq = qkd[:rows], diag[:rows]       # sublane-aligned split (rows % 8 == 0)
    kd, dk = qkd[rows:], diag[rows:]

    # is_query=True: per-row max stabilisation, eps added OUTSIDE the exp.
    q_max = jnp.max(qd, axis=-1, keepdims=True)
    q_dash = ratio * (jnp.exp(qd - dq - q_max) + eps)             # (rows, m_pad)
    # is_query=False: eps INSIDE the exponent, no max (exactly as in the module).
    k_dash = ratio * jnp.exp(kd - dk + eps)                       # (rows, m_pad)
    # Padded q' lanes equal ratio*eps but only ever meet the exact zeros of k'.

    q3 = q_dash.reshape(hpb, n, m_pad)
    k3 = k_dash.reshape(hpb, n, m_pad)

    if n <= nb_features:
        # Short-sequence regime (n << m): scores-first order is cheaper and the
        # (hpb, n, n) block is tiny.  Exact re-association of the reference.
        attn = jnp.einsum('hnm,hjm->hnj', q3, k3,
                          preferred_element_type=jnp.float32)      # (hpb, n, n)
        denom = jnp.sum(attn, axis=-1, keepdims=True) + 1e-8
        out = jnp.einsum('hnj,hjd->hnd', attn, v3,
                         preferred_element_type=jnp.float32)       # (hpb, n, d_pad)
    else:
        # Long-sequence regime: reference feature-contraction order; never
        # materialises the O(n^2) score tensor.
        k_sum = jnp.sum(k3, axis=1)                                # (hpb, m_pad)
        denom = jnp.sum(q3 * k_sum[:, None, :], axis=-1,
                        keepdims=True) + 1e-8
        kT = jnp.swapaxes(k3, 1, 2)                                # (hpb, m_pad, n)
        context = jnp.einsum('hmn,hnd->hmd', kT, v3,
                             preferred_element_type=jnp.float32)   # (hpb, m_pad, d_pad)
        out = jnp.einsum('hnm,hmd->hnd', q3, context,
                         preferred_element_type=jnp.float32)

    o_ref[...] = (out * (1.0 / denom)).astype(o_ref.dtype)


def fast_attention(q, k, v, projection_matrix, eps=1e-4, heads_per_block=4):
    """FastAttention.forward (default flags).  q,k,v: (b, h, n, dim_heads)."""
    b, h, n, d = q.shape
    bh = b * h
    m = projection_matrix.shape[0]
    m_pad = -(-m // 128) * 128                      # 266 -> 384 (lane-dense)
    d_pad = -(-d // 128) * 128                      # 64  -> 128 (lane-dense)

    hpb = max(1, min(heads_per_block, bh))
    while bh % hpb:                                 # largest divisor <= request
        hpb -= 1

    data_norm = d ** (-0.25)
    # Fold data_normalizer into the projection; zero-pad feature rows and head
    # columns; pre-transpose to (d_pad, m_pad) so the kernel matmul is direct.
    projT = jnp.pad(projection_matrix.astype(jnp.float32) * data_norm,
                    ((0, m_pad - m), (0, d_pad - d))).T            # (d_pad, m_pad)

    pad_last = ((0, 0), (0, 0), (0, 0), (0, d_pad - d))
    qp = jnp.pad(q.astype(jnp.float32), pad_last).reshape(bh, n, d_pad)
    kp = jnp.pad(k.astype(jnp.float32), pad_last).reshape(bh, n, d_pad)
    vp = jnp.pad(v.astype(jnp.float32), pad_last).reshape(bh, n, d_pad)
    qk = jnp.stack([qp, kp], axis=0)                               # (2, bh, n, d_pad)

    grid = (bh // hpb,)

    flops = (2 * (2 * bh * n) * d_pad * m_pad            # fused projection matmul
             + 2 * bh * n * n * (m_pad + d_pad))         # linear attention
    transcendentals = 2 * bh * n * m_pad                 # the exps dominate
    bytes_accessed = 4 * (qk.size + vp.size + projT.size + bh * n * d_pad)

    out = pl.pallas_call(
        functools.partial(_fast_attention_kernel,
                          nb_features=m, d_true=d, eps=eps),
        out_shape=jax.ShapeDtypeStruct((bh, n, d_pad), q.dtype),
        grid_spec=pltpu.PrefetchScalarGridSpec(
            num_scalar_prefetch=0,
            grid=grid,
            in_specs=[
                pl.BlockSpec((2, hpb, n, d_pad), lambda i: (0, i, 0, 0)),
                pl.BlockSpec((hpb, n, d_pad), lambda i: (i, 0, 0)),
                pl.BlockSpec((d_pad, m_pad), lambda i: (0, 0)),
            ],
            out_specs=pl.BlockSpec((hpb, n, d_pad), lambda i: (i, 0, 0)),
        ),
        compiler_params=pltpu.CompilerParams(
            dimension_semantics=("parallel",)),
        cost_estimate=pl.CostEstimate(
            flops=flops,
            transcendentals=transcendentals,
            bytes_accessed=bytes_accessed),
    )(qk, vp, projT)

    return out[..., :d].reshape(b, h, n, d)


# ----------------------------------------------------------------------------
# Pure-JAX reference (literal port of softmax_kernel + linear_attention)
# ----------------------------------------------------------------------------
def _reference_fast_attention(q, k, v, projection_matrix, eps=1e-4):
    d = q.shape[-1]
    data_normalizer = d ** (-0.25)
    ratio = projection_matrix.shape[0] ** (-0.5)
    dq = jnp.einsum('bhid,jd->bhij', data_normalizer * q, projection_matrix)
    dk = jnp.einsum('bhid,jd->bhij', data_normalizer * k, projection_matrix)
    diag_q = jnp.sum(q ** 2, axis=-1, keepdims=True) / 2.0 * data_normalizer ** 2
    diag_k = jnp.sum(k ** 2, axis=-1, keepdims=True) / 2.0 * data_normalizer ** 2
    q_dash = ratio * (jnp.exp(dq - diag_q
                              - jnp.max(dq, axis=-1, keepdims=True)) + eps)
    k_dash = ratio * jnp.exp(dk - diag_k + eps)
    k_cumsum = jnp.sum(k_dash, axis=-2)
    d_inv = 1.0 / (jnp.einsum('bhnd,bhd->bhn', q_dash, k_cumsum) + 1e-8)
    context = jnp.einsum('bhnd,bhne->bhde', k_dash, v)
    return jnp.einsum('bhde,bhnd,bhn->bhne', context, q_dash, d_inv)


# ----------------------------------------------------------------------------
# Deterministic projection-matrix construction (PyTorch buffer init, scaling=0)
# ----------------------------------------------------------------------------
class _KeyGen:
    def __init__(self, key):
        self._key = key

    def __call__(self):
        self._key, sub = jax.random.split(self._key)
        return sub


def gaussian_orthogonal_random_matrix(key, nb_rows, nb_cols):
    kg = _KeyGen(key)
    nb_full = nb_rows // nb_cols
    blocks = []
    for _ in range(nb_full):
        u = jax.random.normal(kg(), (nb_cols, nb_cols), jnp.float32)
        qm, _ = jnp.linalg.qr(u)
        blocks.append(qm.T)
    rem = nb_rows - nb_full * nb_cols
    if rem > 0:
        u = jax.random.normal(kg(), (nb_cols, nb_cols), jnp.float32)
        qm, _ = jnp.linalg.qr(u)
        blocks.append(qm.T[:rem])
    final = jnp.concatenate(blocks, axis=0)
    multiplier = jnp.linalg.norm(
        jax.random.normal(kg(), (nb_rows, nb_cols), jnp.float32), axis=1)
    return multiplier[:, None] * final


# ----------------------------------------------------------------------------
if __name__ == "__main__":
    B, H, N, DIM_HEAD = 2, 8, 16, 64
    NB_FEAT = int(DIM_HEAD * math.log(DIM_HEAD))   # module default: 266

    key = jax.random.PRNGKey(0)
    kq, kk, kv, kp = jax.random.split(key, 4)
    q = jax.random.normal(kq, (B, H, N, DIM_HEAD), jnp.float32)
    k = jax.random.normal(kk, (B, H, N, DIM_HEAD), jnp.float32)
    v = jax.random.normal(kv, (B, H, N, DIM_HEAD), jnp.float32)
    proj = gaussian_orthogonal_random_matrix(kp, NB_FEAT, DIM_HEAD)

    fwd = jax.jit(fast_attention)
    out = jax.block_until_ready(fwd(q, k, v, proj))

    assert out.shape == (B, H, N, DIM_HEAD), out.shape
    assert bool(jnp.all(jnp.isfinite(out))), "non-finite output"

    ref = _reference_fast_attention(q, k, v, proj)
    err = float(jnp.max(jnp.abs(out - ref)))
    # f32 MXU operands + exact reciprocal: expected error ~1e-5; the assert is
    # kept loose so it stays robust across MXU f32-precision defaults.
    assert bool(jnp.allclose(out, ref, rtol=5e-2, atol=5e-2)), (
        "max abs err = %f" % err)

    print("KERNEL_OK")
</pallas_src>

<mosaic_0001>
module attributes {stable_mosaic.version = 11 : i64} {
  func.func @_fast_attention_kernel(%arg0: i32, %arg1: memref<2x4x16x128xf32, #tpu.memory_space<vmem>>, %arg2: memref<4x16x128xf32, #tpu.memory_space<vmem>>, %arg3: memref<128x384xf32, #tpu.memory_space<vmem>>, %arg4: memref<4x16x128xf32, #tpu.memory_space<vmem>>) attributes {dimension_semantics = [#tpu.dimension_semantics<parallel>], iteration_bounds = array<i64: 4>, scalar_prefetch = 0 : i64, scratch_operands = 0 : i64, tpu.core_type = #tpu.core_type<tc>, window_params = [{transform_indices = @transform_0, window_bounds = array<i64: 2, 4, 16, 128>}, {transform_indices = @transform_1, window_bounds = array<i64: 4, 16, 128>}, {pipeline_mode = #tpu.pipeline_mode<synchronous>, transform_indices = @transform_2, window_bounds = array<i64: 128, 384>}, {transform_indices = @transform_3, window_bounds = array<i64: 4, 16, 128>}]} {
    %c0 = arith.constant 0 : index
    %c0_0 = arith.constant 0 : index
    %c0_1 = arith.constant 0 : index
    %c0_2 = arith.constant 0 : index
    %0 = vector.load %arg1[%c0, %c0_0, %c0_1, %c0_2] : memref<2x4x16x128xf32, #tpu.memory_space<vmem>>, vector<2x4x16x128xf32>
    %1 = vector.shape_cast %0 : vector<2x4x16x128xf32> to vector<128x128xf32>
    %c0_3 = arith.constant 0 : index
    %c0_4 = arith.constant 0 : index
    %c0_5 = arith.constant 0 : index
    %2 = vector.load %arg2[%c0_3, %c0_4, %c0_5] : memref<4x16x128xf32, #tpu.memory_space<vmem>>, vector<4x16x128xf32>
    %c0_6 = arith.constant 0 : index
    %c0_7 = arith.constant 0 : index
    %3 = vector.load %arg3[%c0_6, %c0_7] : memref<128x384xf32, #tpu.memory_space<vmem>>, vector<128x384xf32>
    %cst = arith.constant dense<0.000000e+00> : vector<128x384xf32>
    %4 = tpu.matmul %1, %3, %cst {dimension_numbers = #tpu.dot_dimension_numbers<[1], [0], [0], [1], [0, 0, 1, 1], [], []>} : vector<128x128xf32>, vector<128x384xf32>, vector<128x384xf32> -> vector<128x384xf32>
    %5 = arith.mulf %1, %1 : vector<128x128xf32>
    %cst_8 = arith.constant dense<0.000000e+00> : vector<128xf32>
    %6 = vector.multi_reduction <add>, %5, %cst_8 [1] : vector<128x128xf32> to vector<128xf32>
    %7 = vector.shape_cast %6 : vector<128xf32> to vector<128x1xf32>
    %cst_9 = arith.constant 6.250000e-02 : f32
    %8 = vector.broadcast %cst_9 : f32 to vector<128x1xf32>
    %9 = arith.mulf %8, %7 : vector<128x1xf32>
    %10 = tpu.iota {dimensions = array<i32: 1>} : vector<1x384xi32>
    %c266_i32 = arith.constant 266 : i32
    %11 = vector.broadcast %c266_i32 : i32 to vector<1x384xi32>
    %12 = arith.cmpi slt, %10, %11 : vector<1x384xi32>
    %cst_10 = arith.constant 0.000000e+00 : f32
    %cst_11 = arith.constant -1.000000e+30 : f32
    %13 = vector.broadcast %cst_10 : f32 to vector<1x384xf32>
    %14 = vector.broadcast %cst_11 : f32 to vector<1x384xf32>
    %15 = arith.select %12, %13, %14 : vector<1x384xi1>, vector<1x384xf32>
    %16 = vector.broadcast %15 : vector<1x384xf32> to vector<128x384xf32>
    %17 = arith.addf %4, %16 : vector<128x384xf32>
    %18 = vector.extract_strided_slice %17 {offsets = [0, 0], sizes = [64, 384], strides = [1, 1]} : vector<128x384xf32> to vector<64x384xf32>
    %19 = vector.extract_strided_slice %9 {offsets = [0, 0], sizes = [64, 1], strides = [1, 1]} : vector<128x1xf32> to vector<64x1xf32>
    %20 = vector.extract_strided_slice %17 {offsets = [64, 0], sizes = [64, 384], strides = [1, 1]} : vector<128x384xf32> to vector<64x384xf32>
    %21 = vector.extract_strided_slice %9 {offsets = [64, 0], sizes = [64, 1], strides = [1, 1]} : vector<128x1xf32> to vector<64x1xf32>
    %cst_12 = arith.constant dense<0xFF800000> : vector<64xf32>
    %22 = vector.multi_reduction <maximumf>, %18, %cst_12 [1] : vector<64x384xf32> to vector<64xf32>
    %23 = vector.shape_cast %22 : vector<64xf32> to vector<64x1xf32>
    %24 = vector.broadcast %19 : vector<64x1xf32> to vector<64x384xf32>
    %25 = arith.subf %18, %24 : vector<64x384xf32>
    %26 = vector.broadcast %23 : vector<64x1xf32> to vector<64x384xf32>
    %27 = arith.subf %25, %26 : vector<64x384xf32>
    %28 = math.exp %27 : vector<64x384xf32>
    %cst_13 = arith.constant 9.99999974E-5 : f32
    %29 = vector.broadcast %cst_13 : f32 to vector<64x384xf32>
    %30 = arith.addf %28, %29 : vector<64x384xf32>
    %cst_14 = arith.constant 0.0613139346 : f32
    %31 = vector.broadcast %cst_14 : f32 to vector<64x384xf32>
    %32 = arith.mulf %31, %30 : vector<64x384xf32>
    %33 = vector.broadcast %21 : vector<64x1xf32> to vector<64x384xf32>
    %34 = arith.subf %20, %33 : vector<64x384xf32>
    %cst_15 = arith.constant 9.99999974E-5 : f32
    %35 = vector.broadcast %cst_15 : f32 to vector<64x384xf32>
    %36 = arith.addf %34, %35 : vector<64x384xf32>
    %37 = math.exp %36 : vector<64x384xf32>
    %cst_16 = arith.constant 0.0613139346 : f32
    %38 = vector.broadcast %cst_16 : f32 to vector<64x384xf32>
    %39 = arith.mulf %38, %37 : vector<64x384xf32>
    %40 = vector.shape_cast %32 : vector<64x384xf32> to vector<4x16x384xf32>
    %41 = vector.shape_cast %39 : vector<64x384xf32> to vector<4x16x384xf32>
    "tpu.trace_start"() <{level = 10 : i32, message = "hnm,hjm->hnj"}> : () -> ()
    %cst_17 = arith.constant dense<0.000000e+00> : vector<4x16x16xf32>
    %42 = tpu.matmul %40, %41, %cst_17 {dimension_numbers = #tpu.dot_dimension_numbers<[2], [2], [1], [1], [0, 0, 0, 1, 1, 1], [0], [0]>} : vector<4x16x384xf32>, vector<4x16x384xf32>, vector<4x16x16xf32> -> vector<4x16x16xf32>
    "tpu.trace_stop"() : () -> ()
    %cst_18 = arith.constant dense<0.000000e+00> : vector<4x16xf32>
    %43 = vector.multi_reduction <add>, %42, %cst_18 [2] : vector<4x16x16xf32> to vector<4x16xf32>
    %44 = vector.shape_cast %43 : vector<4x16xf32> to vector<4x16x1xf32>
    %cst_19 = arith.constant 9.99999993E-9 : f32
    %45 = vector.broadcast %cst_19 : f32 to vector<4x16x1xf32>
    %46 = arith.addf %44, %45 : vector<4x16x1xf32>
    "tpu.trace_start"() <{level = 10 : i32, message = "hnj,hjd->hnd"}> : () -> ()
    %cst_20 = arith.constant dense<0.000000e+00> : vector<4x16x128xf32>
    %47 = tpu.matmul %42, %2, %cst_20 {dimension_numbers = #tpu.dot_dimension_numbers<[2], [1], [1], [2], [0, 0, 0, 1, 1, 2], [0], [0]>} : vector<4x16x16xf32>, vector<4x16x128xf32>, vector<4x16x128xf32> -> vector<4x16x128xf32>
    "tpu.trace_stop"() : () -> ()
    %cst_21 = arith.constant 1.000000e+00 : f32
    %48 = vector.broadcast %cst_21 : f32 to vector<4x16x1xf32>
    %49 = arith.divf %48, %46 : vector<4x16x1xf32>
    %50 = vector.broadcast %49 : vector<4x16x1xf32> to vector<4x16x128xf32>
    %51 = arith.mulf %47, %50 : vector<4x16x128xf32>
    %c0_22 = arith.constant 0 : index
    %c0_23 = arith.constant 0 : index
    %c0_24 = arith.constant 0 : index
    %52 = vector.load %arg4[%c0_22, %c0_23, %c0_24] : memref<4x16x128xf32, #tpu.memory_space<vmem>>, vector<4x16x128xf32>
    tpu.vector_store %arg4[%c0_22, %c0_23, %c0_24], %51 {strides = array<i32>} : memref<4x16x128xf32, #tpu.memory_space<vmem>>, vector<4x16x128xf32>,
    return
  }
  func.func @transform_0(%arg0: i32) -> (i32, i32, i32, i32) {
    %c0_i32 = arith.constant 0 : i32
    %c0_i32_0 = arith.constant 0 : i32
    %c0_i32_1 = arith.constant 0 : i32
    %c0_i32_2 = arith.constant 0 : i32
    return %c0_i32, %arg0, %c0_i32_0, %c0_i32_1 : i32, i32, i32, i32
  }
  func.func @transform_1(%arg0: i32) -> (i32, i32, i32) {
    %c0_i32 = arith.constant 0 : i32
    %c0_i32_0 = arith.constant 0 : i32
    %c0_i32_1 = arith.constant 0 : i32
    return %arg0, %c0_i32, %c0_i32_0 : i32, i32, i32
  }
  func.func @transform_2(%arg0: i32) -> (i32, i32) {
    %c0_i32 = arith.constant 0 : i32
    %c0_i32_0 = arith.constant 0 : i32
    %c0_i32_1 = arith.constant 0 : i32
    return %c0_i32, %c0_i32_0 : i32, i32
  }
  func.func @transform_3(%arg0: i32) -> (i32, i32, i32) {
    %c0_i32 = arith.constant 0 : i32
    %c0_i32_0 = arith.constant 0 : i32
    %c0_i32_1 = arith.constant 0 : i32
    return %arg0, %c0_i32, %c0_i32_0 : i32, i32, i32
  }
}

</mosaic_0001>

<llo_original>
// kernel: fast_attention.1
$region0: #{fast_attention.1}
  #allocation0 [shape = 'u32[]', space=smem, size = 0x4, offset = 0x4, fixed_abs, tag = 'smem constant byte address 0x4 - core index']
  #allocation1 [shape = 'u32[144,128]{1,0:T(1,128)}', space=vmem, size = 0x12000, scoped, tag = 'internal scratch']
  %s0 = inlined_call_operand.vmem [shape: f32[2,16,16,128], index: 0, kind: input, shape index: {}]
  %s1 = inlined_call_operand.vmem [shape: f32[16,16,128], index: 1, kind: input, shape index: {}]
  %s2 = inlined_call_operand.vmem [shape: f32[128,384], index: 2, kind: input, shape index: {}]
  %s3 = inlined_call_operand.hbm [shape: f32[16,16,128], index: 3, kind: output, shape index: {}]
  %s4 = sld [smem:[#allocation0]]
  $region83: #{fast_attention.1} parent=0
    _
  %s6 = ssub.s32 1, %s4
  %s7 = scalar_select 0, %s6, %s4
  $region1: #{fast_attention.1} parent=0
    #allocation2 [shape = 'u8[131072]{0}', space=vmem, size = 0x20000, scoped, tag = 'input window, operand 0']
    #allocation3 [shape = 'u8[65536]{0}', space=vmem, size = 0x10000, scoped, tag = 'output window, operand 0']
    #allocation4 [shape = 's32[2]{0}', space=sflag, size = 0x8, scoped, tag = 'scoped memory for fast_attention.1']
    %8 = vsyncpa [#allocation4], 0
    %s9 = scalar_lea.sflag [#allocation4], 1
    %10 = vsyncpa %s9, 0
    loop: start=0, step=1, limit=6
    $region2: #{fast_attention.1} parent=1 // loop_pre_header
      _
    $region3: #{fast_attention.1} parent=1 // loop_header
      %s12 = sphi 0, %s16
      %p13 = scmp.ge.s32.totalorder %s12, 6
      %s22 = sphi 0, %s24
      %s25 = sphi 0, %s22
      %s26 = sphi 0, %s25
      %s42 = sphi 0, %s26
      %s48 = sphi 0, %s50
      %s51 = sphi 0, %s48
      %s52 = sphi 0, %s51
      %s68 = sphi 0, %s52
      %s72 = sphi 0, %s72
      %s74 = sphi 0, %s72
      %s75 = sphi 0, %s74
      %s89 = sphi 0, %s75
      %s95 = sphi 0, %s97
      %s98 = sphi 0, %s95
      %s99 = sphi 0, %s98
      %s115 = sphi 0, %s99
    $region4: #{fast_attention.1} parent=1 // loop_header_branch
      %15 = sbr.rel (%p13) target = $region8
    $region5: #{fast_attention.1} parent=1 // loop_body
      %s17 = ssub.s32 %s12, 1
      %s18 = ssub.s32 %s12, 2
      %s19 = sadd.s32 %s12, 1
      %s20 = ssub.s32 %s12, %s19
      %p21 = scmp.eq.s32.totalorder %s20, 0
      %s23 = sadd.s32 %s22, 1
      %s24 = scalar_select %p21, %s22, %s23
      %p27 = pneg %p21
      %p28 = scmp.eq.s32.totalorder %s12, 3
      %p29 = por %p27, %p28
      %p30 = scmp.ne.s32.totalorder %s22, %s25
      %p31 = scmp.eq.s32.totalorder %s12, 0
      %p32 = por %p30, %p31
      %p33 = scmp.ne.s32.totalorder %s22, %s25
      %p34 = scmp.eq.s32.totalorder %s17, 3
      %p35 = por %p33, %p34
      %p36 = scmp.ne.s32.totalorder %s25, %s26
      %p37 = scmp.eq.s32.totalorder %s17, 0
      %p38 = por %p36, %p37
      %p39 = scmp.ne.s32.totalorder %s25, %s26
      %p40 = scmp.eq.s32.totalorder %s18, 3
      %p41 = por %p39, %p40
      %p43 = scmp.ne.s32.totalorder %s26, %s42
      %p44 = scmp.eq.s32.totalorder %s18, 0
      %p45 = por %p43, %p44
      %s46 = ssub.s32 %s12, %s19
      %p47 = scmp.eq.s32.totalorder %s46, 0
      %s49 = sadd.s32 %s48, 1
      %s50 = scalar_select %p47, %s48, %s49
      %p53 = pneg %p47
      %p54 = scmp.eq.s32.totalorder %s12, 3
      %p55 = por %p53, %p54
      %p56 = scmp.ne.s32.totalorder %s48, %s51
      %p57 = scmp.eq.s32.totalorder %s12, 0
      %p58 = por %p56, %p57
      %p59 = scmp.ne.s32.totalorder %s48, %s51
      %p60 = scmp.eq.s32.totalorder %s17, 3
      %p61 = por %p59, %p60
      %p62 = scmp.ne.s32.totalorder %s51, %s52
      %p63 = scmp.eq.s32.totalorder %s17, 0
      %p64 = por %p62, %p63
      %p65 = scmp.ne.s32.totalorder %s51, %s52
      %p66 = scmp.eq.s32.totalorder %s18, 3
      %p67 = por %p65, %p66
      %p69 = scmp.ne.s32.totalorder %s52, %s68
      %p70 = scmp.eq.s32.totalorder %s18, 0
      %p71 = por %p69, %p70
      %s73 = sadd.s32 %s72, 1
      %p76 = scmp.eq.s32.totalorder %s12, 3
      %p77 = scmp.ne.s32.totalorder %s72, %s74
      %p78 = scmp.eq.s32.totalorder %s12, 0
      %p79 = por %p77, %p78
      %p80 = scmp.ne.s32.totalorder %s72, %s74
      %p81 = scmp.eq.s32.totalorder %s17, 3
      %p82 = por %p80, %p81
      %p83 = scmp.ne.s32.totalorder %s74, %s75
      %p84 = scmp.eq.s32.totalorder %s17, 0
      %p85 = por %p83, %p84
      %p86 = scmp.ne.s32.totalorder %s74, %s75
      %p87 = scmp.eq.s32.totalorder %s18, 3
      %p88 = por %p86, %p87
      %p90 = scmp.ne.s32.totalorder %s75, %s89
      %p91 = scmp.eq.s32.totalorder %s18, 0
      %p92 = por %p90, %p91
      %s93 = ssub.s32 %s12, %s19
      %p94 = scmp.eq.s32.totalorder %s93, 0
      %s96 = sadd.s32 %s95, 1
      %s97 = scalar_select %p94, %s95, %s96
      %p100 = pneg %p94
      %p101 = scmp.eq.s32.totalorder %s12, 3
      %p102 = por %p100, %p101
      %p103 = scmp.ne.s32.totalorder %s95, %s98
      %p104 = scmp.eq.s32.totalorder %s12, 0
      %p105 = por %p103, %p104
      %p106 = scmp.ne.s32.totalorder %s95, %s98
      %p107 = scmp.eq.s32.totalorder %s17, 3
      %p108 = por %p106, %p107
      %p109 = scmp.ne.s32.totalorder %s98, %s99
      %p110 = scmp.eq.s32.totalorder %s17, 0
      %p111 = por %p109, %p110
      %p112 = scmp.ne.s32.totalorder %s98, %s99
      %p113 = scmp.eq.s32.totalorder %s18, 3
      %p114 = por %p112, %p113
      %p116 = scmp.ne.s32.totalorder %s99, %s115
      %p117 = scmp.eq.s32.totalorder %s18, 0
      %p118 = por %p116, %p117
      %p119 = scmp.le.s32.totalorder 1, %s12
      %p120 = scmp.lt.s32.totalorder %s12, 5
      %p121 = pnand %p119, %p120
      %p122 = pneg %p121
      // Predicated region
      $region9: #{fast_attention.1} parent=5 // pred_check
        _
      $region10: #{fast_attention.1} parent=5 // pred_check_branch
        %124 = sbr.rel (%p121) target = $region12
      $region11: #{fast_attention.1} parent=5 // pred_region
        %s125 = ssub.s32 %s12, 1
        // Predicated region
        $region13: #{fast_attention.1} parent=11 // pred_check
          %p126 = pneg %p85
        $region14: #{fast_attention.1} parent=11 // pred_check_branch
          %128 = sbr.rel (%p126) target = $region16
        $region15: #{fast_attention.1} parent=11 // pred_region
          _
        $region16: #{fast_attention.1} parent=11 // pred_fallthru
          _
      $region12: #{fast_attention.1} parent=5 // pred_fallthru
        _
      %p129 = scmp.lt.s32.totalorder %s12, 4
      // Predicated region
      $region17: #{fast_attention.1} parent=5 // pred_check
        %p130 = pneg %p129
      $region18: #{fast_attention.1} parent=5 // pred_check_branch
        %132 = sbr.rel (%p130) target = $region20
      $region19: #{fast_attention.1} parent=5 // pred_region
        // Predicated region
        $region21: #{fast_attention.1} parent=19 // pred_check
          %p133 = pneg %p32
        $region22: #{fast_attention.1} parent=19 // pred_check_branch
          %135 = sbr.rel (%p133) target = $region24
        $region23: #{fast_attention.1} parent=19 // pred_region
          %s136 = sand.u32 %s22, 1
          %s137 = sand.u32 %s22, 1
          %s138 = smul.addr %s137, 128
          %s139 = scalar_lea.vmem [#allocation2], %s138
          %s140 = smul.u32 4, %s12
          %s141 = smul.addr %s140, 2
          %s142 = smul.addr %s141, 8
          %s143 = scalar_lea.vmem %s0, %s142
          // Predicated region
          $region25: #{fast_attention.1} parent=23 // pred_check
            _
          $region26: #{fast_attention.1} parent=23 // pred_check_branch
            %145 = sbr.rel (0) target = $region28
          $region27: #{fast_attention.1} parent=23 // pred_region
            // Predicated region
            $region29: #{fast_attention.1} parent=27 // pred_check
              _
            $region30: #{fast_attention.1} parent=27 // pred_check_branch
              %147 = sbr.rel (0) target = $region32
            $region31: #{fast_attention.1} parent=27 // pred_region
              // Predicated region
              $region44: #{fast_attention.1} parent=31 // pred_check
                _
              $region45: #{fast_attention.1} parent=31 // pred_check_branch
                %193 = sbr.rel (0) target = $region47
              $region46: #{fast_attention.1} parent=31 // pred_region
                loop: start=0, step=1, limit=1
                $region48: #{fast_attention.1} parent=46 // loop_pre_header
                  _
                $region49: #{fast_attention.1} parent=46 // loop_header
                  %s195 = sphi 0, %s199
                  %p196 = scmp.ge.s32.totalorder %s195, 1
                  %s200 = sphi %s143, %s143
                  %s201 = sphi %s139, %s139
                $region50: #{fast_attention.1} parent=46 // loop_header_branch
                  %198 = sbr.rel (%p196) target = $region54
                $region51: #{fast_attention.1} parent=46 // loop_body
                  %v202 = vld [vmem:[%s200] sm:$0xff]
                  %203 = vst [vmem:[%s201] sm:$0xff] %v202
                  %v204 = vld [vmem:[%s200 + $0x8] sm:$0xff]
                  %205 = vst [vmem:[%s201 + $0x8] sm:$0xff] %v204
                  %v206 = vld [vmem:[%s200 + $0x10] sm:$0xff]
                  %207 = vst [vmem:[%s201 + $0x10] sm:$0xff] %v206
                  %v208 = vld [vmem:[%s200 + $0x18] sm:$0xff]
                  %209 = vst [vmem:[%s201 + $0x18] sm:$0xff] %v208
                  %v210 = vld [vmem:[%s200 + $0x20] sm:$0xff]
                  %211 = vst [vmem:[%s201 + $0x20] sm:$0xff] %v210
                  %v212 = vld [vmem:[%s200 + $0x28] sm:$0xff]
                  %213 = vst [vmem:[%s201 + $0x28] sm:$0xff] %v212
                  %v214 = vld [vmem:[%s200 + $0x30] sm:$0xff]
                  %215 = vst [vmem:[%s201 + $0x30] sm:$0xff] %v214
                  %v216 = vld [vmem:[%s200 + $0x38] sm:$0xff]
                  %217 = vst [vmem:[%s201 + $0x38] sm:$0xff] %v216
                  %v218 = vld [vmem:[%s200 + $0x100] sm:$0xff]
                  %219 = vst [vmem:[%s201 + $0x40] sm:$0xff] %v218
                  %v220 = vld [vmem:[%s200 + $0x108] sm:$0xff]
                  %221 = vst [vmem:[%s201 + $0x48] sm:$0xff] %v220
                  %v222 = vld [vmem:[%s200 + $0x110] sm:$0xff]
                  %223 = vst [vmem:[%s201 + $0x50] sm:$0xff] %v222
                  %v224 = vld [vmem:[%s200 + $0x118] sm:$0xff]
                  %225 = vst [vmem:[%s201 + $0x58] sm:$0xff] %v224
                  %v226 = vld [vmem:[%s200 + $0x120] sm:$0xff]
                  %227 = vst [vmem:[%s201 + $0x60] sm:$0xff] %v226
                  %v228 = vld [vmem:[%s200 + $0x128] sm:$0xff]
                  %229 = vst [vmem:[%s201 + $0x68] sm:$0xff] %v228
                  %v230 = vld [vmem:[%s200 + $0x130] sm:$0xff]
                  %231 = vst [vmem:[%s201 + $0x70] sm:$0xff] %v230
                  %v232 = vld [vmem:[%s200 + $0x138] sm:$0xff]
                  %233 = vst [vmem:[%s201 + $0x78] sm:$0xff] %v232
                $region52: #{fast_attention.1} parent=46 // loop_footer
                  %s199 = sadd.s32 1, %s195
                $region53: #{fast_attention.1} parent=46 // loop_footer_branch
                  %194 = sbr.rel target = $region49
                $region54: #{fast_attention.1} parent=46 // loop_exit
                  _
              $region47: #{fast_attention.1} parent=31 // pred_fallthru
                _
              // Predicated region
              $region55: #{fast_attention.1} parent=31 // pred_check
                _
              $region56: #{fast_attention.1} parent=31 // pred_check_branch
                %235 = sbr.rel target = $region58
              $region57: #{fast_attention.1} parent=31 // pred_region
                _
              $region58: #{fast_attention.1} parent=31 // pred_fallthru
                _
            $region32: #{fast_attention.1} parent=27 // pred_fallthru
              _
            // Predicated region
            $region33: #{fast_attention.1} parent=27 // pred_check
              _
            $region34: #{fast_attention.1} parent=27 // pred_check_branch
              %149 = sbr.rel target = $region36
            $region35: #{fast_attention.1} parent=27 // pred_region
              %s151 = ssub.s32 256, 1
              loop: start=0, step=1, limit=1
              $region37: #{fast_attention.1} parent=35 // loop_pre_header
                _
              $region38: #{fast_attention.1} parent=35 // loop_header
                %s153 = sphi 0, %s157
                %p154 = scmp.ge.s32.totalorder %s153, 1
                %s158 = sphi %s143, %s143
                %s159 = sphi %s139, %s139
              $region39: #{fast_attention.1} parent=35 // loop_header_branch
                %156 = sbr.rel (%p154) target = $region43
              $region40: #{fast_attention.1} parent=35 // loop_body
                %v160 = vld [vmem:[%s158] sm:%s151]
                %161 = vst [vmem:[%s159] sm:%s151] %v160
                %v162 = vld [vmem:[%s158 + $0x8] sm:%s151]
                %163 = vst [vmem:[%s159 + $0x8] sm:%s151] %v162
                %v164 = vld [vmem:[%s158 + $0x10] sm:%s151]
                %165 = vst [vmem:[%s159 + $0x10] sm:%s151] %v164
                %v166 = vld [vmem:[%s158 + $0x18] sm:%s151]
                %167 = vst [vmem:[%s159 + $0x18] sm:%s151] %v166
                %v168 = vld [vmem:[%s158 + $0x20] sm:%s151]
                %169 = vst [vmem:[%s159 + $0x20] sm:%s151] %v168
                %v170 = vld [vmem:[%s158 + $0x28] sm:%s151]
                %171 = vst [vmem:[%s159 + $0x28] sm:%s151] %v170
                %v172 = vld [vmem:[%s158 + $0x30] sm:%s151]
                %173 = vst [vmem:[%s159 + $0x30] sm:%s151] %v172
                %v174 = vld [vmem:[%s158 + $0x38] sm:%s151]
                %175 = vst [vmem:[%s159 + $0x38] sm:%s151] %v174
                %v176 = vld [vmem:[%s158 + $0x100] sm:%s151]
                %177 = vst [vmem:[%s159 + $0x40] sm:%s151] %v176
                %v178 = vld [vmem:[%s158 + $0x108] sm:%s151]
                %179 = vst [vmem:[%s159 + $0x48] sm:%s151] %v178
                %v180 = vld [vmem:[%s158 + $0x110] sm:%s151]
                %181 = vst [vmem:[%s159 + $0x50] sm:%s151] %v180
                %v182 = vld [vmem:[%s158 + $0x118] sm:%s151]
                %183 = vst [vmem:[%s159 + $0x58] sm:%s151] %v182
                %v184 = vld [vmem:[%s158 + $0x120] sm:%s151]
                %185 = vst [vmem:[%s159 + $0x60] sm:%s151] %v184
                %v186 = vld [vmem:[%s158 + $0x128] sm:%s151]
                %187 = vst [vmem:[%s159 + $0x68] sm:%s151] %v186
                %v188 = vld [vmem:[%s158 + $0x130] sm:%s151]
                %189 = vst [vmem:[%s159 + $0x70] sm:%s151] %v188
                %v190 = vld [vmem:[%s158 + $0x138] sm:%s151]
                %191 = vst [vmem:[%s159 + $0x78] sm:%s151] %v190
              $region41: #{fast_attention.1} parent=35 // loop_footer
                %s157 = sadd.s32 1, %s153
              $region42: #{fast_attention.1} parent=35 // loop_footer_branch
                %152 = sbr.rel target = $region38
              $region43: #{fast_attention.1} parent=35 // loop_exit
                _
            $region36: #{fast_attention.1} parent=27 // pred_fallthru
              _
          $region28: #{fast_attention.1} parent=23 // pred_fallthru
            _
          %236 = vnop
        $region24: #{fast_attention.1} parent=19 // pred_fallthru
          _
        // Predicated region
        $region59: #{fast_attention.1} parent=19 // pred_check
          %p237 = pneg %p58
        $region60: #{fast_attention.1} parent=19 // pred_check_branch
          %239 = sbr.rel (%p237) target = $region62
        $region61: #{fast_attention.1} parent=19 // pred_region
          %s240 = smul.u32 4, %s12
          %p241 = scmp.lt.s32.totalorder %s240, 15
          %s242 = scalar_select %p241, %s240, 15
          %s243 = smul.addr %s242, 2
          %s244 = smul.addr %s243, 8
          %s245 = scalar_lea.vmem %s1, %s244
          %s246 = smul.u32 4, %s12
        $region62: #{fast_attention.1} parent=19 // pred_fallthru
          _
      $region20: #{fast_attention.1} parent=5 // pred_fallthru
        _
      %p247 = scmp.le.s32.totalorder 1, %s12
      %p248 = scmp.lt.s32.totalorder %s12, 5
      %p249 = pnand %p247, %p248
      %p250 = pneg %p249
      // Predicated region
      $region63: #{fast_attention.1} parent=5 // pred_check
        _
      $region64: #{fast_attention.1} parent=5 // pred_check_branch
        %252 = sbr.rel (%p249) target = $region66
      $region65: #{fast_attention.1} parent=5 // pred_region
        %s253 = ssub.s32 %s12, 1
        %s254 = sand.u32 %s25, 1
        %s255 = sand.u32 %s25, 1
        %s256 = smul.addr %s255, 128
        %s257 = scalar_lea.vmem [#allocation2], %s256
        // Predicated region
        $region67: #{fast_attention.1} parent=65 // pred_check
          %p258 = pneg %p38
        $region68: #{fast_attention.1} parent=65 // pred_check_branch
          %260 = sbr.rel (%p258) target = $region70
        $region69: #{fast_attention.1} parent=65 // pred_region
          _
        $region70: #{fast_attention.1} parent=65 // pred_fallthru
          _
        %s261 = sand.u32 %s25, 1
        %s262 = sand.u32 %s25, 1
        %s263 = smul.addr %s262, 128
        %s264 = scalar_lea.vmem [#allocation2], %s263
        %p265 = pneg %p38
        %p266 = pneg %p35
        %s267 = smul.u32 4, %s17
        %p268 = scmp.lt.s32.totalorder %s267, 15
        %s269 = scalar_select %p268, %s267, 15
        %s270 = smul.addr %s269, 2
        %s271 = smul.addr %s270, 8
        %s272 = scalar_lea.vmem %s1, %s271
        %p273 = pneg %p64
        %p274 = pneg %p61
        %p275 = pneg %p85
        %p276 = pneg %p82
        %p277 = pneg %p111
        %p278 = pneg %p108
        %s279 = sand.u32 %s98, 1
        %s280 = scalar_lea.sflag [#allocation4], %s279
        %s281 = sand.u32 %s98, 1
        %s282 = smul.addr %s281, 64
        %s283 = scalar_lea.vmem [#allocation3], %s282
        %s284 = smul.u32 4, %s17
        %s285 = smul.u32 4, %s17
        %p286 = scmp.lt.s32.totalorder %s285, 15
        %s287 = scalar_select %p286, %s285, 15
        %s288 = smul.addr %s287, 2
        %s289 = smul.addr %s288, 8
        %s290 = scalar_lea.vmem %s1, %s289
        %s291 = smul.u32 4, %s17
        %s292 = smul.u32 4, %s17
        %v293 = vld [vmem:[%s257] sm:$0xff]
        %v294 = vld [vmem:[%s257 + $0x8] sm:$0xff]
        %v295 = vld [vmem:[%s257 + $0x10] sm:$0xff]
        %v296 = vld [vmem:[%s257 + $0x18] sm:$0xff]
        %v297 = vld [vmem:[%s257 + $0x20] sm:$0xff]
        %v298 = vld [vmem:[%s257 + $0x28] sm:$0xff]
        %v299 = vld [vmem:[%s257 + $0x30] sm:$0xff]
        %v300 = vld [vmem:[%s257 + $0x38] sm:$0xff]
        %v301 = vld [vmem:[%s257 + $0x40] sm:$0xff]
        %v302 = vld [vmem:[%s257 + $0x48] sm:$0xff]
        %v303 = vld [vmem:[%s257 + $0x50] sm:$0xff]
        %v304 = vld [vmem:[%s257 + $0x58] sm:$0xff]
        %v305 = vld [vmem:[%s257 + $0x60] sm:$0xff]
        %v306 = vld [vmem:[%s257 + $0x68] sm:$0xff]
        %v307 = vld [vmem:[%s257 + $0x70] sm:$0xff]
        %v308 = vld [vmem:[%s257 + $0x78] sm:$0xff]
        %v309 = vld [vmem:[%s290] sm:$0xff]
        %v310 = vld [vmem:[%s290 + $0x8] sm:$0xff]
        %v311 = vld [vmem:[%s290 + $0x10] sm:$0xff]
        %v312 = vld [vmem:[%s290 + $0x18] sm:$0xff]
        %v313 = vld [vmem:[%s290 + $0x20] sm:$0xff]
        %v314 = vld [vmem:[%s290 + $0x28] sm:$0xff]
        %v315 = vld [vmem:[%s290 + $0x30] sm:$0xff]
        %v316 = vld [vmem:[%s290 + $0x38] sm:$0xff]
        %v317 = vld [vmem:[%s2] sm:$0xff]
        %v318 = vld [vmem:[%s2 + $0x8] sm:$0xff]
        %v319 = vld [vmem:[%s2 + $0x10] sm:$0xff]
        %v320 = vld [vmem:[%s2 + $0x18] sm:$0xff]
        %v321 = vld [vmem:[%s2 + $0x20] sm:$0xff]
        %v322 = vld [vmem:[%s2 + $0x28] sm:$0xff]
        %v323 = vld [vmem:[%s2 + $0x30] sm:$0xff]
        %v324 = vld [vmem:[%s2 + $0x38] sm:$0xff]
        %v325 = vld [vmem:[%s2 + $0x40] sm:$0xff]
        %v326 = vld [vmem:[%s2 + $0x48] sm:$0xff]
        %v327 = vld [vmem:[%s2 + $0x50] sm:$0xff]
        %v328 = vld [vmem:[%s2 + $0x58] sm:$0xff]
        %v329 = vld [vmem:[%s2 + $0x60] sm:$0xff]
        %v330 = vld [vmem:[%s2 + $0x68] sm:$0xff]
        %v331 = vld [vmem:[%s2 + $0x70] sm:$0xff]
        %v332 = vld [vmem:[%s2 + $0x78] sm:$0xff]
        %v333 = vld [vmem:[%s2 + $0x80] sm:$0xff]
        %v334 = vld [vmem:[%s2 + $0x88] sm:$0xff]
        %v335 = vld [vmem:[%s2 + $0x90] sm:$0xff]
        %v336 = vld [vmem:[%s2 + $0x98] sm:$0xff]
        %v337 = vld [vmem:[%s2 + $0xa0] sm:$0xff]
        %v338 = vld [vmem:[%s2 + $0xa8] sm:$0xff]
        %v339 = vld [vmem:[%s2 + $0xb0] sm:$0xff]
        %v340 = vld [vmem:[%s2 + $0xb8] sm:$0xff]
        %v341 = vld [vmem:[%s2 + $0xc0] sm:$0xff]
        %v342 = vld [vmem:[%s2 + $0xc8] sm:$0xff]
        %v343 = vld [vmem:[%s2 + $0xd0] sm:$0xff]
        %v344 = vld [vmem:[%s2 + $0xd8] sm:$0xff]
        %v345 = vld [vmem:[%s2 + $0xe0] sm:$0xff]
        %v346 = vld [vmem:[%s2 + $0xe8] sm:$0xff]
        %v347 = vld [vmem:[%s2 + $0xf0] sm:$0xff]
        %v348 = vld [vmem:[%s2 + $0xf8] sm:$0xff]
        %v349 = vld [vmem:[%s2 + $0x100] sm:$0xff]
        %v350 = vld [vmem:[%s2 + $0x108] sm:$0xff]
        %v351 = vld [vmem:[%s2 + $0x110] sm:$0xff]
        %v352 = vld [vmem:[%s2 + $0x118] sm:$0xff]
        %v353 = vld [vmem:[%s2 + $0x120] sm:$0xff]
        %v354 = vld [vmem:[%s2 + $0x128] sm:$0xff]
        %v355 = vld [vmem:[%s2 + $0x130] sm:$0xff]
        %v356 = vld [vmem:[%s2 + $0x138] sm:$0xff]
        %v357 = vld [vmem:[%s2 + $0x140] sm:$0xff]
        %v358 = vld [vmem:[%s2 + $0x148] sm:$0xff]
        %v359 = vld [vmem:[%s2 + $0x150] sm:$0xff]
        %v360 = vld [vmem:[%s2 + $0x158] sm:$0xff]
        %v361 = vld [vmem:[%s2 + $0x160] sm:$0xff]
        %v362 = vld [vmem:[%s2 + $0x168] sm:$0xff]
        %v363 = vld [vmem:[%s2 + $0x170] sm:$0xff]
        %v364 = vld [vmem:[%s2 + $0x178] sm:$0xff]
        %v365 = vmul.f32 %v293, %v293
        %v366 = vmul.f32 %v294, %v294
        %v367 = vmul.f32 %v295, %v295
        %v368 = vmul.f32 %v296, %v296
        %v369 = vmul.f32 %v297, %v297
        %v370 = vmul.f32 %v298, %v298
        %v371 = vmul.f32 %v299, %v299
        %v372 = vmul.f32 %v300, %v300
        %v373 = vmul.f32 %v301, %v301
        %v374 = vmul.f32 %v302, %v302
        %v375 = vmul.f32 %v303, %v303
        %v376 = vmul.f32 %v304, %v304
        %v377 = vmul.f32 %v305, %v305
        %v378 = vmul.f32 %v306, %v306
        %v379 = vmul.f32 %v307, %v307
        %v380 = vmul.f32 %v308, %v308
        %381 = vadd.xlane.f32.xlu0 %v365
        %v382 = vpop.xlane.xlu0 %381
        %383 = vadd.xlane.f32.xlu0 %v366
        %v384 = vpop.xlane.xlu0 %383
        %385 = vadd.xlane.f32.xlu0 %v367
        %v386 = vpop.xlane.xlu0 %385
        %387 = vadd.xlane.f32.xlu0 %v368
        %v388 = vpop.xlane.xlu0 %387
        %389 = vadd.xlane.f32.xlu0 %v369
        %v390 = vpop.xlane.xlu0 %389
        %391 = vadd.xlane.f32.xlu0 %v370
        %v392 = vpop.xlane.xlu0 %391
        %393 = vadd.xlane.f32.xlu0 %v371
        %v394 = vpop.xlane.xlu0 %393
        %395 = vadd.xlane.f32.xlu0 %v372
        %v396 = vpop.xlane.xlu0 %395
        %397 = vadd.xlane.f32.xlu0 %v373
        %v398 = vpop.xlane.xlu0 %397
        %399 = vadd.xlane.f32.xlu0 %v374
        %v400 = vpop.xlane.xlu0 %399
        %401 = vadd.xlane.f32.xlu0 %v375
        %v402 = vpop.xlane.xlu0 %401
        %403 = vadd.xlane.f32.xlu0 %v376
        %v404 = vpop.xlane.xlu0 %403
        %405 = vadd.xlane.f32.xlu0 %v377
        %v406 = vpop.xlane.xlu0 %405
        %407 = vadd.xlane.f32.xlu0 %v378
        %v408 = vpop.xlane.xlu0 %407
        %409 = vadd.xlane.f32.xlu0 %v379
        %v410 = vpop.xlane.xlu0 %409
        %411 = vadd.xlane.f32.xlu0 %v380
        %v412 = vpop.xlane.xlu0 %411
        %v413 = vmul.f32 %v382, 0.0625
        %v414 = vmul.f32 %v384, 0.0625
        %v415 = vmul.f32 %v386, 0.0625
        %v416 = vmul.f32 %v388, 0.0625
        %v417 = vmul.f32 %v390, 0.0625
        %v418 = vmul.f32 %v392, 0.0625
        %v419 = vmul.f32 %v394, 0.0625
        %v420 = vmul.f32 %v396, 0.0625
        %v421 = vmul.f32 %v398, 0.0625
        %v422 = vmul.f32 %v400, 0.0625
        %v423 = vmul.f32 %v402, 0.0625
        %v424 = vmul.f32 %v404, 0.0625
        %v425 = vmul.f32 %v406, 0.0625
        %v426 = vmul.f32 %v408, 0.0625
        %v427 = vmul.f32 %v410, 0.0625
        %v428 = vmul.f32 %v412, 0.0625
        %v429 = vlaneseq
        %v430 = vand.u32 %v429, 127
        %v431 = vadd.s32 %v430, 128
        %v432 = vadd.s32 %v430, 256
        %vm433 = vcmp.lt.s32.totalorder %v430, 266
        %vm434 = vcmp.lt.s32.totalorder %v431, 266
        %vm435 = vcmp.lt.s32.totalorder %v432, 266
        %v436 = vsel %vm433, 0.0, -1e+30
        %v437 = vsel %vm434, 0.0, -1e+30
        %v438 = vsel %vm435, 0.0, -1e+30
        %439 = vmatprep.subr.mxu0 %v363
        %440 = vmatpush1.msra.mxu0 %v362
        %441 = vmatprep.subr.mxu0 %v360
        %442 = vmatpush1.msra.mxu0 %v359
        %443 = vmatprep.subr.mxu0 %v357
        %444 = vmatpush1.msra.mxu0 %v356
        %445 = vmatprep.subr.mxu0 %v354
        %446 = vmatpush1.msra.mxu0 %v353
        %447 = vmatprep.subr.mxu0 %v351
        %448 = vmatpush1.msra.mxu0 %v350
        %449 = vmatprep.subr.mxu0 %v348
        %450 = vmatpush1.msra.mxu0 %v347
        %451 = vmatprep.subr.mxu0 %v345
        %452 = vmatpush1.msra.mxu0 %v344
        %453 = vmatprep.subr.mxu0 %v342
        %454 = vmatpush1.msra.mxu0 %v341
        %455 = vmatprep.subr.mxu0 %v339
        %456 = vmatpush1.msra.mxu0 %v338
        %457 = vmatprep.subr.mxu0 %v336
        %458 = vmatpush1.msra.mxu0 %v335
        %459 = vmatprep.subr.mxu0 %v333
        %460 = vmatpush1.msra.mxu0 %v332
        %461 = vmatprep.subr.mxu0 %v330
        %462 = vmatpush1.msra.mxu0 %v329
        %463 = vmatprep.subr.mxu0 %v327
        %464 = vmatpush1.msra.mxu0 %v326
        %465 = vmatprep.subr.mxu0 %v324
        %466 = vmatpush1.msra.mxu0 %v323
        %467 = vmatprep.subr.mxu0 %v321
        %468 = vmatpush1.msra.mxu0 %v320
        %469 = vmatprep.subr.mxu0 %v318
        %470 = vmatpush1.msra.mxu0 %v317
        %471 = vmatprep.subr.mxu0 0.0
        %472 = vmatpush2.msra.mxu0 0.0
        %473 = vmatprep.subr.mxu0 0.0
        %474 = vmatpush2.msra.mxu0 0.0
        %475 = vmatprep.subr.mxu0 0.0
        %476 = vmatpush2.msra.mxu0 0.0
        %477 = vmatprep.subr.mxu0 0.0
        %478 = vmatpush2.msra.mxu0 0.0
        %479 = vmatprep.subr.mxu0 0.0
        %480 = vmatpush2.msra.mxu0 0.0
        %481 = vmatprep.subr.mxu0 0.0
        %482 = vmatpush2.msra.mxu0 0.0
        %483 = vmatprep.subr.mxu0 0.0
        %484 = vmatpush2.msra.mxu0 0.0
        %485 = vmatprep.subr.mxu0 0.0
        %486 = vmatpush2.msra.mxu0 0.0
        %487 = vmatprep.subr.mxu0 0.0
        %488 = vmatpush2.msra.mxu0 0.0
        %489 = vmatprep.subr.mxu0 0.0
        %490 = vmatpush2.msra.mxu0 0.0
        %491 = vmatprep.subr.mxu0 0.0
        %492 = vmatpush2.msra.mxu0 0.0
        %493 = vmatprep.subr.mxu0 0.0
        %494 = vmatpush2.msra.mxu0 0.0
        %495 = vmatprep.subr.mxu0 0.0
        %496 = vmatpush2.msra.mxu0 0.0
        %497 = vmatprep.subr.mxu0 0.0
        %498 = vmatpush2.msra.mxu0 0.0
        %499 = vmatprep.subr.mxu0 0.0
        %500 = vmatpush2.msra.mxu0 0.0
        %501 = vmatprep.subr.mxu0 0.0
        %502 = vmatpush2.msra.mxu0 0.0
        %503 = vmatprep.mubr.f32.mxu0 0.0
        %504 = vmatmul.mubr.f32.gmra.mxu0 %v293
        %v505 = vpop.f32.mrf.mxu0
        %v506 = vadd.f32 %v436, %v505
        %v507 = vpop.f32.mrf.mxu0
        %v508 = vadd.f32 %v437, %v507
        %509 = vmatprep.mubr.f32.mxu0 0.0
        %510 = vmatmul.mubr.f32.gmra.mxu0 %v294
        %v511 = vpop.f32.mrf.mxu0
        %v512 = vadd.f32 %v436, %v511
        %v513 = vpop.f32.mrf.mxu0
        %v514 = vadd.f32 %v437, %v513
        %515 = vmatprep.mubr.f32.mxu0 0.0
        %516 = vmatmul.mubr.f32.gmra.mxu0 %v295
        %v517 = vpop.f32.mrf.mxu0
        %v518 = vadd.f32 %v436, %v517
        %v519 = vpop.f32.mrf.mxu0
        %v520 = vadd.f32 %v437, %v519
        %521 = vmatprep.mubr.f32.mxu0 0.0
        %522 = vmatmul.mubr.f32.gmra.mxu0 %v296
        %v523 = vpop.f32.mrf.mxu0
        %v524 = vadd.f32 %v436, %v523
        %v525 = vpop.f32.mrf.mxu0
        %v526 = vadd.f32 %v437, %v525
        %527 = vmatprep.mubr.f32.mxu0 0.0
        %528 = vmatmul.mubr.f32.gmra.mxu0 %v297
        %v529 = vpop.f32.mrf.mxu0
        %v530 = vadd.f32 %v436, %v529
        %v531 = vpop.f32.mrf.mxu0
        %v532 = vadd.f32 %v437, %v531
        %533 = vmatprep.mubr.f32.mxu0 0.0
        %534 = vmatmul.mubr.f32.gmra.mxu0 %v298
        %v535 = vpop.f32.mrf.mxu0
        %v536 = vadd.f32 %v436, %v535
        %v537 = vpop.f32.mrf.mxu0
        %v538 = vadd.f32 %v437, %v537
        %539 = vmatprep.mubr.f32.mxu0 0.0
        %540 = vmatmul.mubr.f32.gmra.mxu0 %v299
        %v541 = vpop.f32.mrf.mxu0
        %v542 = vadd.f32 %v436, %v541
        %v543 = vpop.f32.mrf.mxu0
        %v544 = vadd.f32 %v437, %v543
        %545 = vmatprep.mubr.f32.mxu0 0.0
        %546 = vmatmul.mubr.f32.gmra.mxu0 %v300
        %v547 = vpop.f32.mrf.mxu0
        %v548 = vadd.f32 %v436, %v547
        %v549 = vpop.f32.mrf.mxu0
        %v550 = vadd.f32 %v437, %v549
        %551 = vmatprep.mubr.f32.mxu0 0.0
        %552 = vmatmul.mubr.f32.gmra.mxu0 %v301
        %v553 = vpop.f32.mrf.mxu0
        %v554 = vadd.f32 %v436, %v553
        %v555 = vpop.f32.mrf.mxu0
        %v556 = vadd.f32 %v437, %v555
        %557 = vmatprep.mubr.f32.mxu0 0.0
        %558 = vmatmul.mubr.f32.gmra.mxu0 %v302
        %v559 = vpop.f32.mrf.mxu0
        %v560 = vadd.f32 %v436, %v559
        %v561 = vpop.f32.mrf.mxu0
        %v562 = vadd.f32 %v437, %v561
        %563 = vmatprep.mubr.f32.mxu0 0.0
        %564 = vmatmul.mubr.f32.gmra.mxu0 %v303
        %v565 = vpop.f32.mrf.mxu0
        %v566 = vadd.f32 %v436, %v565
        %v567 = vpop.f32.mrf.mxu0
        %v568 = vadd.f32 %v437, %v567
        %569 = vmatprep.mubr.f32.mxu0 0.0
        %570 = vmatmul.mubr.f32.gmra.mxu0 %v304
        %v571 = vpop.f32.mrf.mxu0
        %v572 = vadd.f32 %v436, %v571
        %v573 = vpop.f32.mrf.mxu0
        %v574 = vadd.f32 %v437, %v573
        %575 = vmatprep.mubr.f32.mxu0 0.0
        %576 = vmatmul.mubr.f32.gmra.mxu0 %v305
        %v577 = vpop.f32.mrf.mxu0
        %v578 = vadd.f32 %v436, %v577
        %v579 = vpop.f32.mrf.mxu0
        %v580 = vadd.f32 %v437, %v579
        %581 = vmatprep.mubr.f32.mxu0 0.0
        %582 = vmatmul.mubr.f32.gmra.mxu0 %v306
        %v583 = vpop.f32.mrf.mxu0
        %v584 = vadd.f32 %v436, %v583
        %v585 = vpop.f32.mrf.mxu0
        %v586 = vadd.f32 %v437, %v585
        %587 = vmatprep.mubr.f32.mxu0 0.0
        %588 = vmatmul.mubr.f32.gmra.mxu0 %v307
        %v589 = vpop.f32.mrf.mxu0
        %v590 = vadd.f32 %v436, %v589
        %v591 = vpop.f32.mrf.mxu0
        %v592 = vadd.f32 %v437, %v591
        %593 = vmatprep.mubr.f32.mxu0 0.0
        %594 = vmatmul.mubr.f32.gmra.mxu0 %v308
        %v595 = vpop.f32.mrf.mxu0
        %v596 = vadd.f32 %v436, %v595
        %v597 = vpop.f32.mrf.mxu0
        %v598 = vadd.f32 %v437, %v597
        %599 = vdwg.mxu0
        %600 = vmatprep.subr.mxu0 0.0
        %601 = vmatpush1.msra.mxu0 %v364
        %602 = vmatprep.subr.mxu0 0.0
        %603 = vmatpush1.msra.mxu0 %v361
        %604 = vmatprep.subr.mxu0 0.0
        %605 = vmatpush1.msra.mxu0 %v358
        %606 = vmatprep.subr.mxu0 0.0
        %607 = vmatpush1.msra.mxu0 %v355
        %608 = vmatprep.subr.mxu0 0.0
        %609 = vmatpush1.msra.mxu0 %v352
        %610 = vmatprep.subr.mxu0 0.0
        %611 = vmatpush1.msra.mxu0 %v349
        %612 = vmatprep.subr.mxu0 0.0
        %613 = vmatpush1.msra.mxu0 %v346
        %614 = vmatprep.subr.mxu0 0.0
        %615 = vmatpush1.msra.mxu0 %v343
        %616 = vmatprep.subr.mxu0 0.0
        %617 = vmatpush1.msra.mxu0 %v340
        %618 = vmatprep.subr.mxu0 0.0
        %619 = vmatpush1.msra.mxu0 %v337
        %620 = vmatprep.subr.mxu0 0.0
        %621 = vmatpush1.msra.mxu0 %v334
        %622 = vmatprep.subr.mxu0 0.0
        %623 = vmatpush1.msra.mxu0 %v331
        %624 = vmatprep.subr.mxu0 0.0
        %625 = vmatpush1.msra.mxu0 %v328
        %626 = vmatprep.subr.mxu0 0.0
        %627 = vmatpush1.msra.mxu0 %v325
        %628 = vmatprep.subr.mxu0 0.0
        %629 = vmatpush1.msra.mxu0 %v322
        %630 = vmatprep.subr.mxu0 0.0
        %631 = vmatpush1.msra.mxu0 %v319
        %632 = vmatprep.subr.mxu0 0.0
        %633 = vmatpush2.msra.mxu0 0.0
        %634 = vmatprep.subr.mxu0 0.0
        %635 = vmatpush2.msra.mxu0 0.0
        %636 = vmatprep.subr.mxu0 0.0
        %637 = vmatpush2.msra.mxu0 0.0
        %638 = vmatprep.subr.mxu0 0.0
        %639 = vmatpush2.msra.mxu0 0.0
        %640 = vmatprep.subr.mxu0 0.0
        %641 = vmatpush2.msra.mxu0 0.0
        %642 = vmatprep.subr.mxu0 0.0
        %643 = vmatpush2.msra.mxu0 0.0
        %644 = vmatprep.subr.mxu0 0.0
        %645 = vmatpush2.msra.mxu0 0.0
        %646 = vmatprep.subr.mxu0 0.0
        %647 = vmatpush2.msra.mxu0 0.0
        %648 = vmatprep.subr.mxu0 0.0
        %649 = vmatpush2.msra.mxu0 0.0
        %650 = vmatprep.subr.mxu0 0.0
        %651 = vmatpush2.msra.mxu0 0.0
        %652 = vmatprep.subr.mxu0 0.0
        %653 = vmatpush2.msra.mxu0 0.0
        %654 = vmatprep.subr.mxu0 0.0
        %655 = vmatpush2.msra.mxu0 0.0
        %656 = vmatprep.subr.mxu0 0.0
        %657 = vmatpush2.msra.mxu0 0.0
        %658 = vmatprep.subr.mxu0 0.0
        %659 = vmatpush2.msra.mxu0 0.0
        %660 = vmatprep.subr.mxu0 0.0
        %661 = vmatpush2.msra.mxu0 0.0
        %662 = vmatprep.subr.mxu0 0.0
        %663 = vmatpush2.msra.mxu0 0.0
        %664 = vmatprep.mubr.f32.mxu0 0.0
        %665 = vmatmul.mubr.f32.gmra.mxu0 %v293
        %v666 = vpop.f32.mrf.mxu0
        %v667 = vadd.f32 %v438, %v666
        %v668 = vpop.f32.mrf.mxu0
        %669 = vmatprep.mubr.f32.mxu0 0.0
        %670 = vmatmul.mubr.f32.gmra.mxu0 %v294
        %v671 = vpop.f32.mrf.mxu0
        %v672 = vadd.f32 %v438, %v671
        %v673 = vpop.f32.mrf.mxu0
        %674 = vmatprep.mubr.f32.mxu0 0.0
        %675 = vmatmul.mubr.f32.gmra.mxu0 %v295
        %v676 = vpop.f32.mrf.mxu0
        %v677 = vadd.f32 %v438, %v676
        %v678 = vpop.f32.mrf.mxu0
        %679 = vmatprep.mubr.f32.mxu0 0.0
        %680 = vmatmul.mubr.f32.gmra.mxu0 %v296
        %v681 = vpop.f32.mrf.mxu0
        %v682 = vadd.f32 %v438, %v681
        %v683 = vpop.f32.mrf.mxu0
        %684 = vmatprep.mubr.f32.mxu0 0.0
        %685 = vmatmul.mubr.f32.gmra.mxu0 %v297
        %v686 = vpop.f32.mrf.mxu0
        %v687 = vadd.f32 %v438, %v686
        %v688 = vpop.f32.mrf.mxu0
        %689 = vmatprep.mubr.f32.mxu0 0.0
        %690 = vmatmul.mubr.f32.gmra.mxu0 %v298
        %v691 = vpop.f32.mrf.mxu0
        %v692 = vadd.f32 %v438, %v691
        %v693 = vpop.f32.mrf.mxu0
        %694 = vmatprep.mubr.f32.mxu0 0.0
        %695 = vmatmul.mubr.f32.gmra.mxu0 %v299
        %v696 = vpop.f32.mrf.mxu0
        %v697 = vadd.f32 %v438, %v696
        %v698 = vpop.f32.mrf.mxu0
        %699 = vmatprep.mubr.f32.mxu0 0.0
        %700 = vmatmul.mubr.f32.gmra.mxu0 %v300
        %v701 = vpop.f32.mrf.mxu0
        %v702 = vadd.f32 %v438, %v701
        %v703 = vpop.f32.mrf.mxu0
        %704 = vmatprep.mubr.f32.mxu0 0.0
        %705 = vmatmul.mubr.f32.gmra.mxu0 %v301
        %v706 = vpop.f32.mrf.mxu0
        %v707 = vadd.f32 %v438, %v706
        %v708 = vpop.f32.mrf.mxu0
        %709 = vmatprep.mubr.f32.mxu0 0.0
        %710 = vmatmul.mubr.f32.gmra.mxu0 %v302
        %v711 = vpop.f32.mrf.mxu0
        %v712 = vadd.f32 %v438, %v711
        %v713 = vpop.f32.mrf.mxu0
        %714 = vmatprep.mubr.f32.mxu0 0.0
        %715 = vmatmul.mubr.f32.gmra.mxu0 %v303
        %v716 = vpop.f32.mrf.mxu0
        %v717 = vadd.f32 %v438, %v716
        %v718 = vpop.f32.mrf.mxu0
        %719 = vmatprep.mubr.f32.mxu0 0.0
        %720 = vmatmul.mubr.f32.gmra.mxu0 %v304
        %v721 = vpop.f32.mrf.mxu0
        %v722 = vadd.f32 %v438, %v721
        %v723 = vpop.f32.mrf.mxu0
        %724 = vmatprep.mubr.f32.mxu0 0.0
        %725 = vmatmul.mubr.f32.gmra.mxu0 %v305
        %v726 = vpop.f32.mrf.mxu0
        %v727 = vadd.f32 %v438, %v726
        %v728 = vpop.f32.mrf.mxu0
        %729 = vmatprep.mubr.f32.mxu0 0.0
        %730 = vmatmul.mubr.f32.gmra.mxu0 %v306
        %v731 = vpop.f32.mrf.mxu0
        %v732 = vadd.f32 %v438, %v731
        %v733 = vpop.f32.mrf.mxu0
        %734 = vmatprep.mubr.f32.mxu0 0.0
        %735 = vmatmul.mubr.f32.gmra.mxu0 %v307
        %v736 = vpop.f32.mrf.mxu0
        %v737 = vadd.f32 %v438, %v736
        %v738 = vpop.f32.mrf.mxu0
        %739 = vmatprep.mubr.f32.mxu0 0.0
        %740 = vmatmul.mubr.f32.gmra.mxu0 %v308
        %v741 = vpop.f32.mrf.mxu0
        %v742 = vadd.f32 %v438, %v741
        %v743 = vpop.f32.mrf.mxu0
        %744 = vdwg.mxu0
        %v745 = vmax.f32 %v506, %v508
        %v746 = vmax.f32 %v745, %v667
        %747 = vmax.xlane.f32.xlu0 %v746
        %v748 = vpop.xlane.xlu0 %747
        %v749 = vmax.f32 %v512, %v514
        %v750 = vmax.f32 %v749, %v672
        %751 = vmax.xlane.f32.xlu0 %v750
        %v752 = vpop.xlane.xlu0 %751
        %v753 = vmax.f32 %v518, %v520
        %v754 = vmax.f32 %v753, %v677
        %755 = vmax.xlane.f32.xlu0 %v754
        %v756 = vpop.xlane.xlu0 %755
        %v757 = vmax.f32 %v524, %v526
        %v758 = vmax.f32 %v757, %v682
        %759 = vmax.xlane.f32.xlu0 %v758
        %v760 = vpop.xlane.xlu0 %759
        %v761 = vmax.f32 %v530, %v532
        %v762 = vmax.f32 %v761, %v687
        %763 = vmax.xlane.f32.xlu0 %v762
        %v764 = vpop.xlane.xlu0 %763
        %v765 = vmax.f32 %v536, %v538
        %v766 = vmax.f32 %v765, %v692
        %767 = vmax.xlane.f32.xlu0 %v766
        %v768 = vpop.xlane.xlu0 %767
        %v769 = vmax.f32 %v542, %v544
        %v770 = vmax.f32 %v769, %v697
        %771 = vmax.xlane.f32.xlu0 %v770
        %v772 = vpop.xlane.xlu0 %771
        %v773 = vmax.f32 %v548, %v550
        %v774 = vmax.f32 %v773, %v702
        %775 = vmax.xlane.f32.xlu0 %v774
        %v776 = vpop.xlane.xlu0 %775
        %v777 = vsub.f32 %v506, %v413
        %v778 = vsub.f32 %v508, %v413
        %v779 = vsub.f32 %v667, %v413
        %v780 = vsub.f32 %v512, %v414
        %v781 = vsub.f32 %v514, %v414
        %v782 = vsub.f32 %v672, %v414
        %v783 = vsub.f32 %v518, %v415
        %v784 = vsub.f32 %v520, %v415
        %v785 = vsub.f32 %v677, %v415
        %v786 = vsub.f32 %v524, %v416
        %v787 = vsub.f32 %v526, %v416
        %v788 = vsub.f32 %v682, %v416
        %v789 = vsub.f32 %v530, %v417
        %v790 = vsub.f32 %v532, %v417
        %v791 = vsub.f32 %v687, %v417
        %v792 = vsub.f32 %v536, %v418
        %v793 = vsub.f32 %v538, %v418
        %v794 = vsub.f32 %v692, %v418
        %v795 = vsub.f32 %v542, %v419
        %v796 = vsub.f32 %v544, %v419
        %v797 = vsub.f32 %v697, %v419
        %v798 = vsub.f32 %v548, %v420
        %v799 = vsub.f32 %v550, %v420
        %v800 = vsub.f32 %v702, %v420
        %v801 = vsub.f32 %v777, %v748
        %v802 = vsub.f32 %v778, %v748
        %v803 = vsub.f32 %v779, %v748
        %v804 = vsub.f32 %v780, %v752
        %v805 = vsub.f32 %v781, %v752
        %v806 = vsub.f32 %v782, %v752
        %v807 = vsub.f32 %v783, %v756
        %v808 = vsub.f32 %v784, %v756
        %v809 = vsub.f32 %v785, %v756
        %v810 = vsub.f32 %v786, %v760
        %v811 = vsub.f32 %v787, %v760
        %v812 = vsub.f32 %v788, %v760
        %v813 = vsub.f32 %v789, %v764
        %v814 = vsub.f32 %v790, %v764
        %v815 = vsub.f32 %v791, %v764
        %v816 = vsub.f32 %v792, %v768
        %v817 = vsub.f32 %v793, %v768
        %v818 = vsub.f32 %v794, %v768
        %v819 = vsub.f32 %v795, %v772
        %v820 = vsub.f32 %v796, %v772
        %v821 = vsub.f32 %v797, %v772
        %v822 = vsub.f32 %v798, %v776
        %v823 = vsub.f32 %v799, %v776
        %v824 = vsub.f32 %v800, %v776
        %v825 = vmul.f32 %v801, 1.442695
        %v826 = vpow.pop %v825
        %v827 = vmul.f32 %v802, 1.442695
        %v828 = vpow.pop %v827
        %v829 = vmul.f32 %v803, 1.442695
        %v830 = vpow.pop %v829
        %v831 = vmul.f32 %v804, 1.442695
        %v832 = vpow.pop %v831
        %v833 = vmul.f32 %v805, 1.442695
        %v834 = vpow.pop %v833
        %v835 = vmul.f32 %v806, 1.442695
        %v836 = vpow.pop %v835
        %v837 = vmul.f32 %v807, 1.442695
        %v838 = vpow.pop %v837
        %v839 = vmul.f32 %v808, 1.442695
        %v840 = vpow.pop %v839
        %v841 = vmul.f32 %v809, 1.442695
        %v842 = vpow.pop %v841
        %v843 = vmul.f32 %v810, 1.442695
        %v844 = vpow.pop %v843
        %v845 = vmul.f32 %v811, 1.442695
        %v846 = vpow.pop %v845
        %v847 = vmul.f32 %v812, 1.442695
        %v848 = vpow.pop %v847
        %v849 = vmul.f32 %v813, 1.442695
        %v850 = vpow.pop %v849
        %v851 = vmul.f32 %v814, 1.442695
        %v852 = vpow.pop %v851
        %v853 = vmul.f32 %v815, 1.442695
        %v854 = vpow.pop %v853
        %v855 = vmul.f32 %v816, 1.442695
        %v856 = vpow.pop %v855
        %v857 = vmul.f32 %v817, 1.442695
        %v858 = vpow.pop %v857
        %v859 = vmul.f32 %v818, 1.442695
        %v860 = vpow.pop %v859
        %v861 = vmul.f32 %v819, 1.442695
        %v862 = vpow.pop %v861
        %v863 = vmul.f32 %v820, 1.442695
        %v864 = vpow.pop %v863
        %v865 = vmul.f32 %v821, 1.442695
        %v866 = vpow.pop %v865
        %v867 = vmul.f32 %v822, 1.442695
        %v868 = vpow.pop %v867
        %v869 = vmul.f32 %v823, 1.442695
        %v870 = vpow.pop %v869
        %v871 = vmul.f32 %v824, 1.442695
        %v872 = vpow.pop %v871
        %v873 = vadd.f32 %v826, 0.0001
        %v874 = vadd.f32 %v828, 0.0001
        %v875 = vadd.f32 %v830, 0.0001
        %v876 = vadd.f32 %v832, 0.0001
        %v877 = vadd.f32 %v834, 0.0001
        %v878 = vadd.f32 %v836, 0.0001
        %v879 = vadd.f32 %v838, 0.0001
        %v880 = vadd.f32 %v840, 0.0001
        %v881 = vadd.f32 %v842, 0.0001
        %v882 = vadd.f32 %v844, 0.0001
        %v883 = vadd.f32 %v846, 0.0001
        %v884 = vadd.f32 %v848, 0.0001
        %v885 = vadd.f32 %v850, 0.0001
        %v886 = vadd.f32 %v852, 0.0001
        %v887 = vadd.f32 %v854, 0.0001
        %v888 = vadd.f32 %v856, 0.0001
        %v889 = vadd.f32 %v858, 0.0001
        %v890 = vadd.f32 %v860, 0.0001
        %v891 = vadd.f32 %v862, 0.0001
        %v892 = vadd.f32 %v864, 0.0001
        %v893 = vadd.f32 %v866, 0.0001
        %v894 = vadd.f32 %v868, 0.0001
        %v895 = vadd.f32 %v870, 0.0001
        %v896 = vadd.f32 %v872, 0.0001
        %v897 = vmul.f32 %v873, 0.061313935
        %v898 = vmul.f32 %v874, 0.061313935
        %v899 = vmul.f32 %v875, 0.061313935
        %v900 = vmul.f32 %v876, 0.061313935
        %v901 = vmul.f32 %v877, 0.061313935
        %v902 = vmul.f32 %v878, 0.061313935
        %v903 = vmul.f32 %v879, 0.061313935
        %v904 = vmul.f32 %v880, 0.061313935
        %v905 = vmul.f32 %v881, 0.061313935
        %v906 = vmul.f32 %v882, 0.061313935
        %v907 = vmul.f32 %v883, 0.061313935
        %v908 = vmul.f32 %v884, 0.061313935
        %v909 = vmul.f32 %v885, 0.061313935
        %v910 = vmul.f32 %v886, 0.061313935
        %v911 = vmul.f32 %v887, 0.061313935
        %v912 = vmul.f32 %v888, 0.061313935
        %v913 = vmul.f32 %v889, 0.061313935
        %v914 = vmul.f32 %v890, 0.061313935
        %v915 = vmul.f32 %v891, 0.061313935
        %v916 = vmul.f32 %v892, 0.061313935
        %v917 = vmul.f32 %v893, 0.061313935
        %v918 = vmul.f32 %v894, 0.061313935
        %v919 = vmul.f32 %v895, 0.061313935
        %v920 = vmul.f32 %v896, 0.061313935
        %v921 = vsub.f32 %v554, %v421
        %v922 = vsub.f32 %v556, %v421
        %v923 = vsub.f32 %v707, %v421
        %v924 = vsub.f32 %v560, %v422
        %v925 = vsub.f32 %v562, %v422
        %v926 = vsub.f32 %v712, %v422
        %v927 = vsub.f32 %v566, %v423
        %v928 = vsub.f32 %v568, %v423
        %v929 = vsub.f32 %v717, %v423
        %v930 = vsub.f32 %v572, %v424
        %v931 = vsub.f32 %v574, %v424
        %v932 = vsub.f32 %v722, %v424
        %v933 = vsub.f32 %v578, %v425
        %v934 = vsub.f32 %v580, %v425
        %v935 = vsub.f32 %v727, %v425
        %v936 = vsub.f32 %v584, %v426
        %v937 = vsub.f32 %v586, %v426
        %v938 = vsub.f32 %v732, %v426
        %v939 = vsub.f32 %v590, %v427
        %v940 = vsub.f32 %v592, %v427
        %v941 = vsub.f32 %v737, %v427
        %v942 = vsub.f32 %v596, %v428
        %v943 = vsub.f32 %v598, %v428
        %v944 = vsub.f32 %v742, %v428
        %v945 = vadd.f32 %v921, 0.0001
        %v946 = vadd.f32 %v922, 0.0001
        %v947 = vadd.f32 %v923, 0.0001
        %v948 = vadd.f32 %v924, 0.0001
        %v949 = vadd.f32 %v925, 0.0001
        %v950 = vadd.f32 %v926, 0.0001
        %v951 = vadd.f32 %v927, 0.0001
        %v952 = vadd.f32 %v928, 0.0001
        %v953 = vadd.f32 %v929, 0.0001
        %v954 = vadd.f32 %v930, 0.0001
        %v955 = vadd.f32 %v931, 0.0001
        %v956 = vadd.f32 %v932, 0.0001
        %v957 = vadd.f32 %v933, 0.0001
        %v958 = vadd.f32 %v934, 0.0001
        %v959 = vadd.f32 %v935, 0.0001
        %v960 = vadd.f32 %v936, 0.0001
        %v961 = vadd.f32 %v937, 0.0001
        %v962 = vadd.f32 %v938, 0.0001
        %v963 = vadd.f32 %v939, 0.0001
        %v964 = vadd.f32 %v940, 0.0001
        %v965 = vadd.f32 %v941, 0.0001
        %v966 = vadd.f32 %v942, 0.0001
        %v967 = vadd.f32 %v943, 0.0001
        %v968 = vadd.f32 %v944, 0.0001
        %v969 = vmul.f32 %v945, 1.442695
        %v970 = vpow.pop %v969
        %v971 = vmul.f32 %v946, 1.442695
        %v972 = vpow.pop %v971
        %v973 = vmul.f32 %v947, 1.442695
        %v974 = vpow.pop %v973
        %v975 = vmul.f32 %v948, 1.442695
        %v976 = vpow.pop %v975
        %v977 = vmul.f32 %v949, 1.442695
        %v978 = vpow.pop %v977
        %v979 = vmul.f32 %v950, 1.442695
        %v980 = vpow.pop %v979
        %v981 = vmul.f32 %v951, 1.442695
        %v982 = vpow.pop %v981
        %v983 = vmul.f32 %v952, 1.442695
        %v984 = vpow.pop %v983
        %v985 = vmul.f32 %v953, 1.442695
        %v986 = vpow.pop %v985
        %v987 = vmul.f32 %v954, 1.442695
        %v988 = vpow.pop %v987
        %v989 = vmul.f32 %v955, 1.442695
        %v990 = vpow.pop %v989
        %v991 = vmul.f32 %v956, 1.442695
        %v992 = vpow.pop %v991
        %v993 = vmul.f32 %v957, 1.442695
        %v994 = vpow.pop %v993
        %v995 = vmul.f32 %v958, 1.442695
        %v996 = vpow.pop %v995
        %v997 = vmul.f32 %v959, 1.442695
        %v998 = vpow.pop %v997
        %v999 = vmul.f32 %v960, 1.442695
        %v1000 = vpow.pop %v999
        %v1001 = vmul.f32 %v961, 1.442695
        %v1002 = vpow.pop %v1001
        %v1003 = vmul.f32 %v962, 1.442695
        %v1004 = vpow.pop %v1003
        %v1005 = vmul.f32 %v963, 1.442695
        %v1006 = vpow.pop %v1005
        %v1007 = vmul.f32 %v964, 1.442695
        %v1008 = vpow.pop %v1007
        %v1009 = vmul.f32 %v965, 1.442695
        %v1010 = vpow.pop %v1009
        %v1011 = vmul.f32 %v966, 1.442695
        %v1012 = vpow.pop %v1011
        %v1013 = vmul.f32 %v967, 1.442695
        %v1014 = vpow.pop %v1013
        %v1015 = vmul.f32 %v968, 1.442695
        %v1016 = vpow.pop %v1015
        %v1017 = vmul.f32 %v970, 0.061313935
        %v1018 = vmul.f32 %v972, 0.061313935
        %v1019 = vmul.f32 %v974, 0.061313935
        %v1020 = vmul.f32 %v976, 0.061313935
        %v1021 = vmul.f32 %v978, 0.061313935
        %v1022 = vmul.f32 %v980, 0.061313935
        %v1023 = vmul.f32 %v982, 0.061313935
        %v1024 = vmul.f32 %v984, 0.061313935
        %v1025 = vmul.f32 %v986, 0.061313935
        %v1026 = vmul.f32 %v988, 0.061313935
        %v1027 = vmul.f32 %v990, 0.061313935
        %v1028 = vmul.f32 %v992, 0.061313935
        %v1029 = vmul.f32 %v994, 0.061313935
        %v1030 = vmul.f32 %v996, 0.061313935
        %v1031 = vmul.f32 %v998, 0.061313935
        %v1032 = vmul.f32 %v1000, 0.061313935
        %v1033 = vmul.f32 %v1002, 0.061313935
        %v1034 = vmul.f32 %v1004, 0.061313935
        %v1035 = vmul.f32 %v1006, 0.061313935
        %v1036 = vmul.f32 %v1008, 0.061313935
        %v1037 = vmul.f32 %v1010, 0.061313935
        %v1038 = vmul.f32 %v1012, 0.061313935
        %v1039 = vmul.f32 %v1014, 0.061313935
        %v1040 = vmul.f32 %v1016, 0.061313935
        %1041 = vmatprep.subr.mxu0 0.0
        %1042 = vmatpush1.xpose.msra.mxu0 0.0
        %1043 = vmatprep.subr.mxu0 0.0
        %1044 = vmatpush1.xpose.msra.mxu0 0.0
        %1045 = vmatprep.subr.mxu0 0.0
        %1046 = vmatpush1.xpose.msra.mxu0 0.0
        %1047 = vmatprep.subr.mxu0 0.0
        %1048 = vmatpush1.xpose.msra.mxu0 0.0
        %1049 = vmatprep.subr.mxu0 0.0
        %1050 = vmatpush1.xpose.msra.mxu0 0.0
        %1051 = vmatprep.subr.mxu0 0.0
        %1052 = vmatpush1.xpose.msra.mxu0 0.0
        %1053 = vmatprep.subr.mxu0 0.0
        %1054 = vmatpush1.xpose.msra.mxu0 0.0
        %1055 = vmatprep.subr.mxu0 0.0
        %1056 = vmatpush1.xpose.msra.mxu0 0.0
        %1057 = vmatprep.subr.mxu0 0.0
        %1058 = vmatpush1.xpose.msra.mxu0 0.0
        %1059 = vmatprep.subr.mxu0 0.0
        %1060 = vmatpush1.xpose.msra.mxu0 0.0
        %1061 = vmatprep.subr.mxu0 0.0
        %1062 = vmatpush1.xpose.msra.mxu0 0.0
        %1063 = vmatprep.subr.mxu0 0.0
        %1064 = vmatpush1.xpose.msra.mxu0 0.0
        %1065 = vmatprep.subr.mxu0 0.0
        %1066 = vmatpush1.xpose.msra.mxu0 0.0
        %1067 = vmatprep.subr.mxu0 0.0
        %1068 = vmatpush1.xpose.msra.mxu0 0.0
        %1069 = vmatprep.subr.mxu0 %v1021
        %1070 = vmatpush1.xpose.msra.mxu0 %v1020
        %1071 = vmatprep.subr.mxu0 %v1018
        %1072 = vmatpush1.xpose.msra.mxu0 %v1017
        %1073 = vmatprep.subr.mxu0 0.0
        %1074 = vmatpush2.xpose.msra.mxu0 0.0
        %1075 = vmatprep.subr.mxu0 0.0
        %1076 = vmatpush2.xpose.msra.mxu0 0.0
        %1077 = vmatprep.subr.mxu0 0.0
        %1078 = vmatpush2.xpose.msra.mxu0 0.0
        %1079 = vmatprep.subr.mxu0 0.0
        %1080 = vmatpush2.xpose.msra.mxu0 0.0
        %1081 = vmatprep.subr.mxu0 0.0
        %1082 = vmatpush2.xpose.msra.mxu0 0.0
        %1083 = vmatprep.subr.mxu0 0.0
        %1084 = vmatpush2.xpose.msra.mxu0 0.0
        %1085 = vmatprep.subr.mxu0 0.0
        %1086 = vmatpush2.xpose.msra.mxu0 0.0
        %1087 = vmatprep.subr.mxu0 0.0
        %1088 = vmatpush2.xpose.msra.mxu0 0.0
        %1089 = vmatprep.subr.mxu0 0.0
        %1090 = vmatpush2.xpose.msra.mxu0 0.0
        %1091 = vmatprep.subr.mxu0 0.0
        %1092 = vmatpush2.xpose.msra.mxu0 0.0
        %1093 = vmatprep.subr.mxu0 0.0
        %1094 = vmatpush2.xpose.msra.mxu0 0.0
        %1095 = vmatprep.subr.mxu0 0.0
        %1096 = vmatpush2.xpose.msra.mxu0 0.0
        %1097 = vmatprep.subr.mxu0 0.0
        %1098 = vmatpush2.xpose.msra.mxu0 0.0
        %1099 = vmatprep.subr.mxu0 0.0
        %1100 = vmatpush2.xpose.msra.mxu0 0.0
        %1101 = vmatprep.subr.mxu0 0.0
        %1102 = vmatpush2.xpose.msra.mxu0 0.0
        %1103 = vmatprep.subr.mxu0 0.0
        %1104 = vmatpush2.xpose.msra.mxu0 0.0
        %1105 = vmatprep.mubr.f32.mxu0 %v898
        %1106 = vmatmul.mubr.f32.gmra.mxu0 %v897
        %v1107 = vpop.f32.mrf.mxu0
        %v1108 = vadd.f32 0.0, %v1107
        %v1109 = vpop.f32.mrf.mxu0
        %1110 = vmatprep.mubr.f32.mxu0 %v901
        %1111 = vmatmul.mubr.f32.gmra.mxu0 %v900
        %v1112 = vpop.f32.mrf.mxu0
        %v1113 = vadd.f32 0.0, %v1112
        %v1114 = vpop.f32.mrf.mxu0
        %1115 = vdwg.mxu0
        %1116 = vmatprep.subr.mxu0 0.0
        %1117 = vmatpush1.xpose.msra.mxu0 0.0
        %1118 = vmatprep.subr.mxu0 0.0
        %1119 = vmatpush1.xpose.msra.mxu0 0.0
        %1120 = vmatprep.subr.mxu0 0.0
        %1121 = vmatpush1.xpose.msra.mxu0 0.0
        %1122 = vmatprep.subr.mxu0 0.0
        %1123 = vmatpush1.xpose.msra.mxu0 0.0
        %1124 = vmatprep.subr.mxu0 0.0
        %1125 = vmatpush1.xpose.msra.mxu0 0.0
        %1126 = vmatprep.subr.mxu0 0.0
        %1127 = vmatpush1.xpose.msra.mxu0 0.0
        %1128 = vmatprep.subr.mxu0 0.0
        %1129 = vmatpush1.xpose.msra.mxu0 0.0
        %1130 = vmatprep.subr.mxu0 0.0
        %1131 = vmatpush1.xpose.msra.mxu0 0.0
        %1132 = vmatprep.subr.mxu0 0.0
        %1133 = vmatpush1.xpose.msra.mxu0 0.0
        %1134 = vmatprep.subr.mxu0 0.0
        %1135 = vmatpush1.xpose.msra.mxu0 0.0
        %1136 = vmatprep.subr.mxu0 0.0
        %1137 = vmatpush1.xpose.msra.mxu0 0.0
        %1138 = vmatprep.subr.mxu0 0.0
        %1139 = vmatpush1.xpose.msra.mxu0 0.0
        %1140 = vmatprep.subr.mxu0 0.0
        %1141 = vmatpush1.xpose.msra.mxu0 0.0
        %1142 = vmatprep.subr.mxu0 0.0
        %1143 = vmatpush1.xpose.msra.mxu0 0.0
        %1144 = vmatprep.subr.mxu0 0.0
        %1145 = vmatpush1.xpose.msra.mxu0 %v1022
        %1146 = vmatprep.subr.mxu0 0.0
        %1147 = vmatpush1.xpose.msra.mxu0 %v1019
        %1148 = vmatprep.subr.mxu0 0.0
        %1149 = vmatpush2.xpose.msra.mxu0 0.0
        %1150 = vmatprep.subr.mxu0 0.0
        %1151 = vmatpush2.xpose.msra.mxu0 0.0
        %1152 = vmatprep.subr.mxu0 0.0
        %1153 = vmatpush2.xpose.msra.mxu0 0.0
        %1154 = vmatprep.subr.mxu0 0.0
        %1155 = vmatpush2.xpose.msra.mxu0 0.0
        %1156 = vmatprep.subr.mxu0 0.0
        %1157 = vmatpush2.xpose.msra.mxu0 0.0
        %1158 = vmatprep.subr.mxu0 0.0
        %1159 = vmatpush2.xpose.msra.mxu0 0.0
        %1160 = vmatprep.subr.mxu0 0.0
        %1161 = vmatpush2.xpose.msra.mxu0 0.0
        %1162 = vmatprep.subr.mxu0 0.0
        %1163 = vmatpush2.xpose.msra.mxu0 0.0
        %1164 = vmatprep.subr.mxu0 0.0
        %1165 = vmatpush2.xpose.msra.mxu0 0.0
        %1166 = vmatprep.subr.mxu0 0.0
        %1167 = vmatpush2.xpose.msra.mxu0 0.0
        %1168 = vmatprep.subr.mxu0 0.0
        %1169 = vmatpush2.xpose.msra.mxu0 0.0
        %1170 = vmatprep.subr.mxu0 0.0
        %1171 = vmatpush2.xpose.msra.mxu0 0.0
        %1172 = vmatprep.subr.mxu0 0.0
        %1173 = vmatpush2.xpose.msra.mxu0 0.0
        %1174 = vmatprep.subr.mxu0 0.0
        %1175 = vmatpush2.xpose.msra.mxu0 0.0
        %1176 = vmatprep.subr.mxu0 0.0
        %1177 = vmatpush2.xpose.msra.mxu0 0.0
        %1178 = vmatprep.subr.mxu0 0.0
        %1179 = vmatpush2.xpose.msra.mxu0 0.0
        %1180 = vmatprep.mubr.f32.mxu0 0.0
        %1181 = vmatmul.mubr.f32.gmra.mxu0 %v899
        %v1182 = vpop.f32.mrf.mxu0
        %v1183 = vadd.f32 %v1108, %v1182
        %v1184 = vpop.f32.mrf.mxu0
        %1185 = vmatprep.mubr.f32.mxu0 0.0
        %1186 = vmatmul.mubr.f32.gmra.mxu0 %v902
        %v1187 = vpop.f32.mrf.mxu0
        %v1188 = vadd.f32 %v1113, %v1187
        %v1189 = vpop.f32.mrf.mxu0
        %1190 = vdwg.mxu0
        %1191 = vmatprep.subr.mxu0 0.0
        %1192 = vmatpush1.xpose.msra.mxu0 0.0
        %1193 = vmatprep.subr.mxu0 0.0
        %1194 = vmatpush1.xpose.msra.mxu0 0.0
        %1195 = vmatprep.subr.mxu0 0.0
        %1196 = vmatpush1.xpose.msra.mxu0 0.0
        %1197 = vmatprep.subr.mxu0 0.0
        %1198 = vmatpush1.xpose.msra.mxu0 0.0
        %1199 = vmatprep.subr.mxu0 0.0
        %1200 = vmatpush1.xpose.msra.mxu0 0.0
        %1201 = vmatprep.subr.mxu0 0.0
        %1202 = vmatpush1.xpose.msra.mxu0 0.0
        %1203 = vmatprep.subr.mxu0 0.0
        %1204 = vmatpush1.xpose.msra.mxu0 0.0
        %1205 = vmatprep.subr.mxu0 0.0
        %1206 = vmatpush1.xpose.msra.mxu0 0.0
        %1207 = vmatprep.subr.mxu0 0.0
        %1208 = vmatpush1.xpose.msra.mxu0 0.0
        %1209 = vmatprep.subr.mxu0 0.0
        %1210 = vmatpush1.xpose.msra.mxu0 0.0
        %1211 = vmatprep.subr.mxu0 0.0
        %1212 = vmatpush1.xpose.msra.mxu0 0.0
        %1213 = vmatprep.subr.mxu0 0.0
        %1214 = vmatpush1.xpose.msra.mxu0 0.0
        %1215 = vmatprep.subr.mxu0 0.0
        %1216 = vmatpush1.xpose.msra.mxu0 0.0
        %1217 = vmatprep.subr.mxu0 0.0
        %1218 = vmatpush1.xpose.msra.mxu0 0.0
        %1219 = vmatprep.subr.mxu0 %v1027
        %1220 = vmatpush1.xpose.msra.mxu0 %v1026
        %1221 = vmatprep.subr.mxu0 %v1024
        %1222 = vmatpush1.xpose.msra.mxu0 %v1023
        %1223 = vmatprep.subr.mxu0 0.0
        %1224 = vmatpush2.xpose.msra.mxu0 0.0
        %1225 = vmatprep.subr.mxu0 0.0
        %1226 = vmatpush2.xpose.msra.mxu0 0.0
        %1227 = vmatprep.subr.mxu0 0.0
        %1228 = vmatpush2.xpose.msra.mxu0 0.0
        %1229 = vmatprep.subr.mxu0 0.0
        %1230 = vmatpush2.xpose.msra.mxu0 0.0
        %1231 = vmatprep.subr.mxu0 0.0
        %1232 = vmatpush2.xpose.msra.mxu0 0.0
        %1233 = vmatprep.subr.mxu0 0.0
        %1234 = vmatpush2.xpose.msra.mxu0 0.0
        %1235 = vmatprep.subr.mxu0 0.0
        %1236 = vmatpush2.xpose.msra.mxu0 0.0
        %1237 = vmatprep.subr.mxu0 0.0
        %1238 = vmatpush2.xpose.msra.mxu0 0.0
        %1239 = vmatprep.subr.mxu0 0.0
        %1240 = vmatpush2.xpose.msra.mxu0 0.0
        %1241 = vmatprep.subr.mxu0 0.0
        %1242 = vmatpush2.xpose.msra.mxu0 0.0
        %1243 = vmatprep.subr.mxu0 0.0
        %1244 = vmatpush2.xpose.msra.mxu0 0.0
        %1245 = vmatprep.subr.mxu0 0.0
        %1246 = vmatpush2.xpose.msra.mxu0 0.0
        %1247 = vmatprep.subr.mxu0 0.0
        %1248 = vmatpush2.xpose.msra.mxu0 0.0
        %1249 = vmatprep.subr.mxu0 0.0
        %1250 = vmatpush2.xpose.msra.mxu0 0.0
        %1251 = vmatprep.subr.mxu0 0.0
        %1252 = vmatpush2.xpose.msra.mxu0 0.0
        %1253 = vmatprep.subr.mxu0 0.0
        %1254 = vmatpush2.xpose.msra.mxu0 0.0
        %1255 = vmatprep.mubr.f32.mxu0 %v904
        %1256 = vmatmul.mubr.f32.gmra.mxu0 %v903
        %v1257 = vpop.f32.mrf.mxu0
        %v1258 = vadd.f32 0.0, %v1257
        %v1259 = vpop.f32.mrf.mxu0
        %1260 = vmatprep.mubr.f32.mxu0 %v907
        %1261 = vmatmul.mubr.f32.gmra.mxu0 %v906
        %v1262 = vpop.f32.mrf.mxu0
        %v1263 = vadd.f32 0.0, %v1262
        %v1264 = vpop.f32.mrf.mxu0
        %1265 = vdwg.mxu0
        %1266 = vmatprep.subr.mxu0 0.0
        %1267 = vmatpush1.xpose.msra.mxu0 0.0
        %1268 = vmatprep.subr.mxu0 0.0
        %1269 = vmatpush1.xpose.msra.mxu0 0.0
        %1270 = vmatprep.subr.mxu0 0.0
        %1271 = vmatpush1.xpose.msra.mxu0 0.0
        %1272 = vmatprep.subr.mxu0 0.0
        %1273 = vmatpush1.xpose.msra.mxu0 0.0
        %1274 = vmatprep.subr.mxu0 0.0
        %1275 = vmatpush1.xpose.msra.mxu0 0.0
        %1276 = vmatprep.subr.mxu0 0.0
        %1277 = vmatpush1.xpose.msra.mxu0 0.0
        %1278 = vmatprep.subr.mxu0 0.0
        %1279 = vmatpush1.xpose.msra.mxu0 0.0
        %1280 = vmatprep.subr.mxu0 0.0
        %1281 = vmatpush1.xpose.msra.mxu0 0.0
        %1282 = vmatprep.subr.mxu0 0.0
        %1283 = vmatpush1.xpose.msra.mxu0 0.0
        %1284 = vmatprep.subr.mxu0 0.0
        %1285 = vmatpush1.xpose.msra.mxu0 0.0
        %1286 = vmatprep.subr.mxu0 0.0
        %1287 = vmatpush1.xpose.msra.mxu0 0.0
        %1288 = vmatprep.subr.mxu0 0.0
        %1289 = vmatpush1.xpose.msra.mxu0 0.0
        %1290 = vmatprep.subr.mxu0 0.0
        %1291 = vmatpush1.xpose.msra.mxu0 0.0
        %1292 = vmatprep.subr.mxu0 0.0
        %1293 = vmatpush1.xpose.msra.mxu0 0.0
        %1294 = vmatprep.subr.mxu0 0.0
        %1295 = vmatpush1.xpose.msra.mxu0 %v1028
        %1296 = vmatprep.subr.mxu0 0.0
        %1297 = vmatpush1.xpose.msra.mxu0 %v1025
        %1298 = vmatprep.subr.mxu0 0.0
        %1299 = vmatpush2.xpose.msra.mxu0 0.0
        %1300 = vmatprep.subr.mxu0 0.0
        %1301 = vmatpush2.xpose.msra.mxu0 0.0
        %1302 = vmatprep.subr.mxu0 0.0
        %1303 = vmatpush2.xpose.msra.mxu0 0.0
        %1304 = vmatprep.subr.mxu0 0.0
        %1305 = vmatpush2.xpose.msra.mxu0 0.0
        %1306 = vmatprep.subr.mxu0 0.0
        %1307 = vmatpush2.xpose.msra.mxu0 0.0
        %1308 = vmatprep.subr.mxu0 0.0
        %1309 = vmatpush2.xpose.msra.mxu0 0.0
        %1310 = vmatprep.subr.mxu0 0.0
        %1311 = vmatpush2.xpose.msra.mxu0 0.0
        %1312 = vmatprep.subr.mxu0 0.0
        %1313 = vmatpush2.xpose.msra.mxu0 0.0
        %1314 = vmatprep.subr.mxu0 0.0
        %1315 = vmatpush2.xpose.msra.mxu0 0.0
        %1316 = vmatprep.subr.mxu0 0.0
        %1317 = vmatpush2.xpose.msra.mxu0 0.0
        %1318 = vmatprep.subr.mxu0 0.0
        %1319 = vmatpush2.xpose.msra.mxu0 0.0
        %1320 = vmatprep.subr.mxu0 0.0
        %1321 = vmatpush2.xpose.msra.mxu0 0.0
        %1322 = vmatprep.subr.mxu0 0.0
        %1323 = vmatpush2.xpose.msra.mxu0 0.0
        %1324 = vmatprep.subr.mxu0 0.0
        %1325 = vmatpush2.xpose.msra.mxu0 0.0
        %1326 = vmatprep.subr.mxu0 0.0
        %1327 = vmatpush2.xpose.msra.mxu0 0.0
        %1328 = vmatprep.subr.mxu0 0.0
        %1329 = vmatpush2.xpose.msra.mxu0 0.0
        %1330 = vmatprep.mubr.f32.mxu0 0.0
        %1331 = vmatmul.mubr.f32.gmra.mxu0 %v905
        %v1332 = vpop.f32.mrf.mxu0
        %v1333 = vadd.f32 %v1258, %v1332
        %v1334 = vpop.f32.mrf.mxu0
        %1335 = vmatprep.mubr.f32.mxu0 0.0
        %1336 = vmatmul.mubr.f32.gmra.mxu0 %v908
        %v1337 = vpop.f32.mrf.mxu0
        %v1338 = vadd.f32 %v1263, %v1337
        %v1339 = vpop.f32.mrf.mxu0
        %1340 = vdwg.mxu0
        %1341 = vmatprep.subr.mxu0 0.0
        %1342 = vmatpush1.xpose.msra.mxu0 0.0
        %1343 = vmatprep.subr.mxu0 0.0
        %1344 = vmatpush1.xpose.msra.mxu0 0.0
        %1345 = vmatprep.subr.mxu0 0.0
        %1346 = vmatpush1.xpose.msra.mxu0 0.0
        %1347 = vmatprep.subr.mxu0 0.0
        %1348 = vmatpush1.xpose.msra.mxu0 0.0
        %1349 = vmatprep.subr.mxu0 0.0
        %1350 = vmatpush1.xpose.msra.mxu0 0.0
        %1351 = vmatprep.subr.mxu0 0.0
        %1352 = vmatpush1.xpose.msra.mxu0 0.0
        %1353 = vmatprep.subr.mxu0 0.0
        %1354 = vmatpush1.xpose.msra.mxu0 0.0
        %1355 = vmatprep.subr.mxu0 0.0
        %1356 = vmatpush1.xpose.msra.mxu0 0.0
        %1357 = vmatprep.subr.mxu0 0.0
        %1358 = vmatpush1.xpose.msra.mxu0 0.0
        %1359 = vmatprep.subr.mxu0 0.0
        %1360 = vmatpush1.xpose.msra.mxu0 0.0
        %1361 = vmatprep.subr.mxu0 0.0
        %1362 = vmatpush1.xpose.msra.mxu0 0.0
        %1363 = vmatprep.subr.mxu0 0.0
        %1364 = vmatpush1.xpose.msra.mxu0 0.0
        %1365 = vmatprep.subr.mxu0 0.0
        %1366 = vmatpush1.xpose.msra.mxu0 0.0
        %1367 = vmatprep.subr.mxu0 0.0
        %1368 = vmatpush1.xpose.msra.mxu0 0.0
        %1369 = vmatprep.subr.mxu0 %v1033
        %1370 = vmatpush1.xpose.msra.mxu0 %v1032
        %1371 = vmatprep.subr.mxu0 %v1030
        %1372 = vmatpush1.xpose.msra.mxu0 %v1029
        %1373 = vmatprep.subr.mxu0 0.0
        %1374 = vmatpush2.xpose.msra.mxu0 0.0
        %1375 = vmatprep.subr.mxu0 0.0
        %1376 = vmatpush2.xpose.msra.mxu0 0.0
        %1377 = vmatprep.subr.mxu0 0.0
        %1378 = vmatpush2.xpose.msra.mxu0 0.0
        %1379 = vmatprep.subr.mxu0 0.0
        %1380 = vmatpush2.xpose.msra.mxu0 0.0
        %1381 = vmatprep.subr.mxu0 0.0
        %1382 = vmatpush2.xpose.msra.mxu0 0.0
        %1383 = vmatprep.subr.mxu0 0.0
        %1384 = vmatpush2.xpose.msra.mxu0 0.0
        %1385 = vmatprep.subr.mxu0 0.0
        %1386 = vmatpush2.xpose.msra.mxu0 0.0
        %1387 = vmatprep.subr.mxu0 0.0
        %1388 = vmatpush2.xpose.msra.mxu0 0.0
        %1389 = vmatprep.subr.mxu0 0.0
        %1390 = vmatpush2.xpose.msra.mxu0 0.0
        %1391 = vmatprep.subr.mxu0 0.0
        %1392 = vmatpush2.xpose.msra.mxu0 0.0
        %1393 = vmatprep.subr.mxu0 0.0
        %1394 = vmatpush2.xpose.msra.mxu0 0.0
        %1395 = vmatprep.subr.mxu0 0.0
        %1396 = vmatpush2.xpose.msra.mxu0 0.0
        %1397 = vmatprep.subr.mxu0 0.0
        %1398 = vmatpush2.xpose.msra.mxu0 0.0
        %1399 = vmatprep.subr.mxu0 0.0
        %1400 = vmatpush2.xpose.msra.mxu0 0.0
        %1401 = vmatprep.subr.mxu0 0.0
        %1402 = vmatpush2.xpose.msra.mxu0 0.0
        %1403 = vmatprep.subr.mxu0 0.0
        %1404 = vmatpush2.xpose.msra.mxu0 0.0
        %1405 = vmatprep.mubr.f32.mxu0 %v910
        %1406 = vmatmul.mubr.f32.gmra.mxu0 %v909
        %v1407 = vpop.f32.mrf.mxu0
        %v1408 = vadd.f32 0.0, %v1407
        %v1409 = vpop.f32.mrf.mxu0
        %1410 = vmatprep.mubr.f32.mxu0 %v913
        %1411 = vmatmul.mubr.f32.gmra.mxu0 %v912
        %v1412 = vpop.f32.mrf.mxu0
        %v1413 = vadd.f32 0.0, %v1412
        %v1414 = vpop.f32.mrf.mxu0
        %1415 = vdwg.mxu0
        %1416 = vmatprep.subr.mxu0 0.0
        %1417 = vmatpush1.xpose.msra.mxu0 0.0
        %1418 = vmatprep.subr.mxu0 0.0
        %1419 = vmatpush1.xpose.msra.mxu0 0.0
        %1420 = vmatprep.subr.mxu0 0.0
        %1421 = vmatpush1.xpose.msra.mxu0 0.0
        %1422 = vmatprep.subr.mxu0 0.0
        %1423 = vmatpush1.xpose.msra.mxu0 0.0
        %1424 = vmatprep.subr.mxu0 0.0
        %1425 = vmatpush1.xpose.msra.mxu0 0.0
        %1426 = vmatprep.subr.mxu0 0.0
        %1427 = vmatpush1.xpose.msra.mxu0 0.0
        %1428 = vmatprep.subr.mxu0 0.0
        %1429 = vmatpush1.xpose.msra.mxu0 0.0
        %1430 = vmatprep.subr.mxu0 0.0
        %1431 = vmatpush1.xpose.msra.mxu0 0.0
        %1432 = vmatprep.subr.mxu0 0.0
        %1433 = vmatpush1.xpose.msra.mxu0 0.0
        %1434 = vmatprep.subr.mxu0 0.0
        %1435 = vmatpush1.xpose.msra.mxu0 0.0
        %1436 = vmatprep.subr.mxu0 0.0
        %1437 = vmatpush1.xpose.msra.mxu0 0.0
        %1438 = vmatprep.subr.mxu0 0.0
        %1439 = vmatpush1.xpose.msra.mxu0 0.0
        %1440 = vmatprep.subr.mxu0 0.0
        %1441 = vmatpush1.xpose.msra.mxu0 0.0
        %1442 = vmatprep.subr.mxu0 0.0
        %1443 = vmatpush1.xpose.msra.mxu0 0.0
        %1444 = vmatprep.subr.mxu0 0.0
        %1445 = vmatpush1.xpose.msra.mxu0 %v1034
        %1446 = vmatprep.subr.mxu0 0.0
        %1447 = vmatpush1.xpose.msra.mxu0 %v1031
        %1448 = vmatprep.subr.mxu0 0.0
        %1449 = vmatpush2.xpose.msra.mxu0 0.0
        %1450 = vmatprep.subr.mxu0 0.0
        %1451 = vmatpush2.xpose.msra.mxu0 0.0
        %1452 = vmatprep.subr.mxu0 0.0
        %1453 = vmatpush2.xpose.msra.mxu0 0.0
        %1454 = vmatprep.subr.mxu0 0.0
        %1455 = vmatpush2.xpose.msra.mxu0 0.0
        %1456 = vmatprep.subr.mxu0 0.0
        %1457 = vmatpush2.xpose.msra.mxu0 0.0
        %1458 = vmatprep.subr.mxu0 0.0
        %1459 = vmatpush2.xpose.msra.mxu0 0.0
        %1460 = vmatprep.subr.mxu0 0.0
        %1461 = vmatpush2.xpose.msra.mxu0 0.0
        %1462 = vmatprep.subr.mxu0 0.0
        %1463 = vmatpush2.xpose.msra.mxu0 0.0
        %1464 = vmatprep.subr.mxu0 0.0
        %1465 = vmatpush2.xpose.msra.mxu0 0.0
        %1466 = vmatprep.subr.mxu0 0.0
        %1467 = vmatpush2.xpose.msra.mxu0 0.0
        %1468 = vmatprep.subr.mxu0 0.0
        %1469 = vmatpush2.xpose.msra.mxu0 0.0
        %1470 = vmatprep.subr.mxu0 0.0
        %1471 = vmatpush2.xpose.msra.mxu0 0.0
        %1472 = vmatprep.subr.mxu0 0.0
        %1473 = vmatpush2.xpose.msra.mxu0 0.0
        %1474 = vmatprep.subr.mxu0 0.0
        %1475 = vmatpush2.xpose.msra.mxu0 0.0
        %1476 = vmatprep.subr.mxu0 0.0
        %1477 = vmatpush2.xpose.msra.mxu0 0.0
        %1478 = vmatprep.subr.mxu0 0.0
        %1479 = vmatpush2.xpose.msra.mxu0 0.0
        %1480 = vmatprep.mubr.f32.mxu0 0.0
        %1481 = vmatmul.mubr.f32.gmra.mxu0 %v911
        %v1482 = vpop.f32.mrf.mxu0
        %v1483 = vadd.f32 %v1408, %v1482
        %v1484 = vpop.f32.mrf.mxu0
        %1485 = vmatprep.mubr.f32.mxu0 0.0
        %1486 = vmatmul.mubr.f32.gmra.mxu0 %v914
        %v1487 = vpop.f32.mrf.mxu0
        %v1488 = vadd.f32 %v1413, %v1487
        %v1489 = vpop.f32.mrf.mxu0
        %1490 = vdwg.mxu0
        %1491 = vmatprep.subr.mxu0 0.0
        %1492 = vmatpush1.xpose.msra.mxu0 0.0
        %1493 = vmatprep.subr.mxu0 0.0
        %1494 = vmatpush1.xpose.msra.mxu0 0.0
        %1495 = vmatprep.subr.mxu0 0.0
        %1496 = vmatpush1.xpose.msra.mxu0 0.0
        %1497 = vmatprep.subr.mxu0 0.0
        %1498 = vmatpush1.xpose.msra.mxu0 0.0
        %1499 = vmatprep.subr.mxu0 0.0
        %1500 = vmatpush1.xpose.msra.mxu0 0.0
        %1501 = vmatprep.subr.mxu0 0.0
        %1502 = vmatpush1.xpose.msra.mxu0 0.0
        %1503 = vmatprep.subr.mxu0 0.0
        %1504 = vmatpush1.xpose.msra.mxu0 0.0
        %1505 = vmatprep.subr.mxu0 0.0
        %1506 = vmatpush1.xpose.msra.mxu0 0.0
        %1507 = vmatprep.subr.mxu0 0.0
        %1508 = vmatpush1.xpose.msra.mxu0 0.0
        %1509 = vmatprep.subr.mxu0 0.0
        %1510 = vmatpush1.xpose.msra.mxu0 0.0
        %1511 = vmatprep.subr.mxu0 0.0
        %1512 = vmatpush1.xpose.msra.mxu0 0.0
        %1513 = vmatprep.subr.mxu0 0.0
        %1514 = vmatpush1.xpose.msra.mxu0 0.0
        %1515 = vmatprep.subr.mxu0 0.0
        %1516 = vmatpush1.xpose.msra.mxu0 0.0
        %1517 = vmatprep.subr.mxu0 0.0
        %1518 = vmatpush1.xpose.msra.mxu0 0.0
        %1519 = vmatprep.subr.mxu0 %v1039
        %1520 = vmatpush1.xpose.msra.mxu0 %v1038
        %1521 = vmatprep.subr.mxu0 %v1036
        %1522 = vmatpush1.xpose.msra.mxu0 %v1035
        %1523 = vmatprep.subr.mxu0 0.0
        %1524 = vmatpush2.xpose.msra.mxu0 0.0
        %1525 = vmatprep.subr.mxu0 0.0
        %1526 = vmatpush2.xpose.msra.mxu0 0.0
        %1527 = vmatprep.subr.mxu0 0.0
        %1528 = vmatpush2.xpose.msra.mxu0 0.0
        %1529 = vmatprep.subr.mxu0 0.0
        %1530 = vmatpush2.xpose.msra.mxu0 0.0
        %1531 = vmatprep.subr.mxu0 0.0
        %1532 = vmatpush2.xpose.msra.mxu0 0.0
        %1533 = vmatprep.subr.mxu0 0.0
        %1534 = vmatpush2.xpose.msra.mxu0 0.0
        %1535 = vmatprep.subr.mxu0 0.0
        %1536 = vmatpush2.xpose.msra.mxu0 0.0
        %1537 = vmatprep.subr.mxu0 0.0
        %1538 = vmatpush2.xpose.msra.mxu0 0.0
        %1539 = vmatprep.subr.mxu0 0.0
        %1540 = vmatpush2.xpose.msra.mxu0 0.0
        %1541 = vmatprep.subr.mxu0 0.0
        %1542 = vmatpush2.xpose.msra.mxu0 0.0
        %1543 = vmatprep.subr.mxu0 0.0
        %1544 = vmatpush2.xpose.msra.mxu0 0.0
        %1545 = vmatprep.subr.mxu0 0.0
        %1546 = vmatpush2.xpose.msra.mxu0 0.0
        %1547 = vmatprep.subr.mxu0 0.0
        %1548 = vmatpush2.xpose.msra.mxu0 0.0
        %1549 = vmatprep.subr.mxu0 0.0
        %1550 = vmatpush2.xpose.msra.mxu0 0.0
        %1551 = vmatprep.subr.mxu0 0.0
        %1552 = vmatpush2.xpose.msra.mxu0 0.0
        %1553 = vmatprep.subr.mxu0 0.0
        %1554 = vmatpush2.xpose.msra.mxu0 0.0
        %1555 = vmatprep.mubr.f32.mxu0 %v916
        %1556 = vmatmul.mubr.f32.gmra.mxu0 %v915
        %v1557 = vpop.f32.mrf.mxu0
        %v1558 = vadd.f32 0.0, %v1557
        %v1559 = vpop.f32.mrf.mxu0
        %1560 = vmatprep.mubr.f32.mxu0 %v919
        %1561 = vmatmul.mubr.f32.gmra.mxu0 %v918
        %v1562 = vpop.f32.mrf.mxu0
        %v1563 = vadd.f32 0.0, %v1562
        %v1564 = vpop.f32.mrf.mxu0
        %1565 = vdwg.mxu0
        %1566 = vmatprep.subr.mxu0 0.0
        %1567 = vmatpush1.xpose.msra.mxu0 0.0
        %1568 = vmatprep.subr.mxu0 0.0
        %1569 = vmatpush1.xpose.msra.mxu0 0.0
        %1570 = vmatprep.subr.mxu0 0.0
        %1571 = vmatpush1.xpose.msra.mxu0 0.0
        %1572 = vmatprep.subr.mxu0 0.0
        %1573 = vmatpush1.xpose.msra.mxu0 0.0
        %1574 = vmatprep.subr.mxu0 0.0
        %1575 = vmatpush1.xpose.msra.mxu0 0.0
        %1576 = vmatprep.subr.mxu0 0.0
        %1577 = vmatpush1.xpose.msra.mxu0 0.0
        %1578 = vmatprep.subr.mxu0 0.0
        %1579 = vmatpush1.xpose.msra.mxu0 0.0
        %1580 = vmatprep.subr.mxu0 0.0
        %1581 = vmatpush1.xpose.msra.mxu0 0.0
        %1582 = vmatprep.subr.mxu0 0.0
        %1583 = vmatpush1.xpose.msra.mxu0 0.0
        %1584 = vmatprep.subr.mxu0 0.0
        %1585 = vmatpush1.xpose.msra.mxu0 0.0
        %1586 = vmatprep.subr.mxu0 0.0
        %1587 = vmatpush1.xpose.msra.mxu0 0.0
        %1588 = vmatprep.subr.mxu0 0.0
        %1589 = vmatpush1.xpose.msra.mxu0 0.0
        %1590 = vmatprep.subr.mxu0 0.0
        %1591 = vmatpush1.xpose.msra.mxu0 0.0
        %1592 = vmatprep.subr.mxu0 0.0
        %1593 = vmatpush1.xpose.msra.mxu0 0.0
        %1594 = vmatprep.subr.mxu0 0.0
        %1595 = vmatpush1.xpose.msra.mxu0 %v1040
        %1596 = vmatprep.subr.mxu0 0.0
        %1597 = vmatpush1.xpose.msra.mxu0 %v1037
        %1598 = vmatprep.subr.mxu0 0.0
        %1599 = vmatpush2.xpose.msra.mxu0 0.0
        %1600 = vmatprep.subr.mxu0 0.0
        %1601 = vmatpush2.xpose.msra.mxu0 0.0
        %1602 = vmatprep.subr.mxu0 0.0
        %1603 = vmatpush2.xpose.msra.mxu0 0.0
        %1604 = vmatprep.subr.mxu0 0.0
        %1605 = vmatpush2.xpose.msra.mxu0 0.0
        %1606 = vmatprep.subr.mxu0 0.0
        %1607 = vmatpush2.xpose.msra.mxu0 0.0
        %1608 = vmatprep.subr.mxu0 0.0
        %1609 = vmatpush2.xpose.msra.mxu0 0.0
        %1610 = vmatprep.subr.mxu0 0.0
        %1611 = vmatpush2.xpose.msra.mxu0 0.0
        %1612 = vmatprep.subr.mxu0 0.0
        %1613 = vmatpush2.xpose.msra.mxu0 0.0
        %1614 = vmatprep.subr.mxu0 0.0
        %1615 = vmatpush2.xpose.msra.mxu0 0.0
        %1616 = vmatprep.subr.mxu0 0.0
        %1617 = vmatpush2.xpose.msra.mxu0 0.0
        %1618 = vmatprep.subr.mxu0 0.0
        %1619 = vmatpush2.xpose.msra.mxu0 0.0
        %1620 = vmatprep.subr.mxu0 0.0
        %1621 = vmatpush2.xpose.msra.mxu0 0.0
        %1622 = vmatprep.subr.mxu0 0.0
        %1623 = vmatpush2.xpose.msra.mxu0 0.0
        %1624 = vmatprep.subr.mxu0 0.0
        %1625 = vmatpush2.xpose.msra.mxu0 0.0
        %1626 = vmatprep.subr.mxu0 0.0
        %1627 = vmatpush2.xpose.msra.mxu0 0.0
        %1628 = vmatprep.subr.mxu0 0.0
        %1629 = vmatpush2.xpose.msra.mxu0 0.0
        %1630 = vmatprep.mubr.f32.mxu0 0.0
        %1631 = vmatmul.mubr.f32.gmra.mxu0 %v917
        %v1632 = vpop.f32.mrf.mxu0
        %v1633 = vadd.f32 %v1558, %v1632
        %v1634 = vpop.f32.mrf.mxu0
        %1635 = vmatprep.mubr.f32.mxu0 0.0
        %1636 = vmatmul.mubr.f32.gmra.mxu0 %v920
        %v1637 = vpop.f32.mrf.mxu0
        %v1638 = vadd.f32 %v1563, %v1637
        %v1639 = vpop.f32.mrf.mxu0
        %1640 = vdwg.mxu0
        %vm1641 = vcmask 130048
        %v1642 = vsel %vm1641, %v1183, 0.0
        %1643 = vadd.xlane.f32.xlu0 %v1642
        %v1644 = vpop.xlane.xlu0 %1643
        %v1645 = vsel %vm1641, %v1188, 0.0
        %1646 = vadd.xlane.f32.xlu0 %v1645
        %v1647 = vpop.xlane.xlu0 %1646
        %v1648 = vsel %vm1641, %v1333, 0.0
        %1649 = vadd.xlane.f32.xlu0 %v1648
        %v1650 = vpop.xlane.xlu0 %1649
        %v1651 = vsel %vm1641, %v1338, 0.0
        %1652 = vadd.xlane.f32.xlu0 %v1651
        %v1653 = vpop.xlane.xlu0 %1652
        %v1654 = vsel %vm1641, %v1483, 0.0
        %1655 = vadd.xlane.f32.xlu0 %v1654
        %v1656 = vpop.xlane.xlu0 %1655
        %v1657 = vsel %vm1641, %v1488, 0.0
        %1658 = vadd.xlane.f32.xlu0 %v1657
        %v1659 = vpop.xlane.xlu0 %1658
        %v1660 = vsel %vm1641, %v1633, 0.0
        %1661 = vadd.xlane.f32.xlu0 %v1660
        %v1662 = vpop.xlane.xlu0 %1661
        %v1663 = vsel %vm1641, %v1638, 0.0
        %1664 = vadd.xlane.f32.xlu0 %v1663
        %v1665 = vpop.xlane.xlu0 %1664
        %v1666 = vadd.f32 %v1644, 1e-08
        %v1667 = vadd.f32 %v1647, 1e-08
        %v1668 = vadd.f32 %v1650, 1e-08
        %v1669 = vadd.f32 %v1653, 1e-08
        %v1670 = vadd.f32 %v1656, 1e-08
        %v1671 = vadd.f32 %v1659, 1e-08
        %v1672 = vadd.f32 %v1662, 1e-08
        %v1673 = vadd.f32 %v1665, 1e-08
        %v1675 = vsel %vm1641, %v1183, 0
        %v1678 = vsel %vm1641, %v1188, 0
        %1680 = vmatprep.subr.mxu0 0.0
        %1681 = vmatpush1.msra.mxu0 0.0
        %1682 = vmatprep.subr.mxu0 0.0
        %1683 = vmatpush1.msra.mxu0 0.0
        %1684 = vmatprep.subr.mxu0 0.0
        %1685 = vmatpush1.msra.mxu0 0.0
        %1686 = vmatprep.subr.mxu0 0.0
        %1687 = vmatpush1.msra.mxu0 0.0
        %1688 = vmatprep.subr.mxu0 0.0
        %1689 = vmatpush1.msra.mxu0 0.0
        %1690 = vmatprep.subr.mxu0 0.0
        %1691 = vmatpush1.msra.mxu0 0.0
        %1692 = vmatprep.subr.mxu0 0.0
        %1693 = vmatpush1.msra.mxu0 0.0
        %1694 = vmatprep.subr.mxu0 0.0
        %1695 = vmatpush1.msra.mxu0 0.0
        %1696 = vmatprep.subr.mxu0 0.0
        %1697 = vmatpush1.msra.mxu0 0.0
        %1698 = vmatprep.subr.mxu0 0.0
        %1699 = vmatpush1.msra.mxu0 0.0
        %1700 = vmatprep.subr.mxu0 0.0
        %1701 = vmatpush1.msra.mxu0 0.0
        %1702 = vmatprep.subr.mxu0 0.0
        %1703 = vmatpush1.msra.mxu0 0.0
        %1704 = vmatprep.subr.mxu0 0.0
        %1705 = vmatpush1.msra.mxu0 0.0
        %1706 = vmatprep.subr.mxu0 0.0
        %1707 = vmatpush1.msra.mxu0 0.0
        %1708 = vmatprep.subr.mxu0 0.0
        %1709 = vmatpush1.msra.mxu0 %v310
        %1710 = vmatprep.subr.mxu0 0.0
        %1711 = vmatpush1.msra.mxu0 %v309
        %1712 = vmatprep.subr.mxu0 0.0
        %1713 = vmatpush2.msra.mxu0 0.0
        %1714 = vmatprep.subr.mxu0 0.0
        %1715 = vmatpush2.msra.mxu0 0.0
        %1716 = vmatprep.subr.mxu0 0.0
        %1717 = vmatpush2.msra.mxu0 0.0
        %1718 = vmatprep.subr.mxu0 0.0
        %1719 = vmatpush2.msra.mxu0 0.0
        %1720 = vmatprep.subr.mxu0 0.0
        %1721 = vmatpush2.msra.mxu0 0.0
        %1722 = vmatprep.subr.mxu0 0.0
        %1723 = vmatpush2.msra.mxu0 0.0
        %1724 = vmatprep.subr.mxu0 0.0
        %1725 = vmatpush2.msra.mxu0 0.0
        %1726 = vmatprep.subr.mxu0 0.0
        %1727 = vmatpush2.msra.mxu0 0.0
        %1728 = vmatprep.subr.mxu0 0.0
        %1729 = vmatpush2.msra.mxu0 0.0
        %1730 = vmatprep.subr.mxu0 0.0
        %1731 = vmatpush2.msra.mxu0 0.0
        %1732 = vmatprep.subr.mxu0 0.0
        %1733 = vmatpush2.msra.mxu0 0.0
        %1734 = vmatprep.subr.mxu0 0.0
        %1735 = vmatpush2.msra.mxu0 0.0
        %1736 = vmatprep.subr.mxu0 0.0
        %1737 = vmatpush2.msra.mxu0 0.0
        %1738 = vmatprep.subr.mxu0 0.0
        %1739 = vmatpush2.msra.mxu0 0.0
        %1740 = vmatprep.subr.mxu0 0.0
        %1741 = vmatpush2.msra.mxu0 0.0
        %1742 = vmatprep.subr.mxu0 0.0
        %1743 = vmatpush2.msra.mxu0 0.0
        %1744 = vmatprep.mubr.f32.mxu0 0.0
        %1745 = vmatmul.mubr.f32.gmra.mxu0 %v1675
        %v1746 = vpop.f32.mrf.mxu0
        %v1747 = vadd.f32 0.0, %v1746
        %v1748 = vpop.f32.mrf.mxu0
        %1749 = vmatprep.mubr.f32.mxu0 0.0
        %1750 = vmatmul.mubr.f32.gmra.mxu0 %v1678
        %v1751 = vpop.f32.mrf.mxu0
        %v1752 = vadd.f32 0.0, %v1751
        %v1753 = vpop.f32.mrf.mxu0
        %1754 = vdwg.mxu0
        %v1756 = vsel %vm1641, %v1333, 0
        %v1759 = vsel %vm1641, %v1338, 0
        %1761 = vmatprep.subr.mxu0 0.0
        %1762 = vmatpush1.msra.mxu0 0.0
        %1763 = vmatprep.subr.mxu0 0.0
        %1764 = vmatpush1.msra.mxu0 0.0
        %1765 = vmatprep.subr.mxu0 0.0
        %1766 = vmatpush1.msra.mxu0 0.0
        %1767 = vmatprep.subr.mxu0 0.0
        %1768 = vmatpush1.msra.mxu0 0.0
        %1769 = vmatprep.subr.mxu0 0.0
        %1770 = vmatpush1.msra.mxu0 0.0
        %1771 = vmatprep.subr.mxu0 0.0
        %1772 = vmatpush1.msra.mxu0 0.0
        %1773 = vmatprep.subr.mxu0 0.0
        %1774 = vmatpush1.msra.mxu0 0.0
        %1775 = vmatprep.subr.mxu0 0.0
        %1776 = vmatpush1.msra.mxu0 0.0
        %1777 = vmatprep.subr.mxu0 0.0
        %1778 = vmatpush1.msra.mxu0 0.0
        %1779 = vmatprep.subr.mxu0 0.0
        %1780 = vmatpush1.msra.mxu0 0.0
        %1781 = vmatprep.subr.mxu0 0.0
        %1782 = vmatpush1.msra.mxu0 0.0
        %1783 = vmatprep.subr.mxu0 0.0
        %1784 = vmatpush1.msra.mxu0 0.0
        %1785 = vmatprep.subr.mxu0 0.0
        %1786 = vmatpush1.msra.mxu0 0.0
        %1787 = vmatprep.subr.mxu0 0.0
        %1788 = vmatpush1.msra.mxu0 0.0
        %1789 = vmatprep.subr.mxu0 0.0
        %1790 = vmatpush1.msra.mxu0 %v312
        %1791 = vmatprep.subr.mxu0 0.0
        %1792 = vmatpush1.msra.mxu0 %v311
        %1793 = vmatprep.subr.mxu0 0.0
        %1794 = vmatpush2.msra.mxu0 0.0
        %1795 = vmatprep.subr.mxu0 0.0
        %1796 = vmatpush2.msra.mxu0 0.0
        %1797 = vmatprep.subr.mxu0 0.0
        %1798 = vmatpush2.msra.mxu0 0.0
        %1799 = vmatprep.subr.mxu0 0.0
        %1800 = vmatpush2.msra.mxu0 0.0
        %1801 = vmatprep.subr.mxu0 0.0
        %1802 = vmatpush2.msra.mxu0 0.0
        %1803 = vmatprep.subr.mxu0 0.0
        %1804 = vmatpush2.msra.mxu0 0.0
        %1805 = vmatprep.subr.mxu0 0.0
        %1806 = vmatpush2.msra.mxu0 0.0
        %1807 = vmatprep.subr.mxu0 0.0
        %1808 = vmatpush2.msra.mxu0 0.0
        %1809 = vmatprep.subr.mxu0 0.0
        %1810 = vmatpush2.msra.mxu0 0.0
        %1811 = vmatprep.subr.mxu0 0.0
        %1812 = vmatpush2.msra.mxu0 0.0
        %1813 = vmatprep.subr.mxu0 0.0
        %1814 = vmatpush2.msra.mxu0 0.0
        %1815 = vmatprep.subr.mxu0 0.0
        %1816 = vmatpush2.msra.mxu0 0.0
        %1817 = vmatprep.subr.mxu0 0.0
        %1818 = vmatpush2.msra.mxu0 0.0
        %1819 = vmatprep.subr.mxu0 0.0
        %1820 = vmatpush2.msra.mxu0 0.0
        %1821 = vmatprep.subr.mxu0 0.0
        %1822 = vmatpush2.msra.mxu0 0.0
        %1823 = vmatprep.subr.mxu0 0.0
        %1824 = vmatpush2.msra.mxu0 0.0
        %1825 = vmatprep.mubr.f32.mxu0 0.0
        %1826 = vmatmul.mubr.f32.gmra.mxu0 %v1756
        %v1827 = vpop.f32.mrf.mxu0
        %v1828 = vadd.f32 0.0, %v1827
        %v1829 = vpop.f32.mrf.mxu0
        %1830 = vmatprep.mubr.f32.mxu0 0.0
        %1831 = vmatmul.mubr.f32.gmra.mxu0 %v1759
        %v1832 = vpop.f32.mrf.mxu0
        %v1833 = vadd.f32 0.0, %v1832
        %v1834 = vpop.f32.mrf.mxu0
        %1835 = vdwg.mxu0
        %v1837 = vsel %vm1641, %v1483, 0
        %v1840 = vsel %vm1641, %v1488, 0
        %1842 = vmatprep.subr.mxu0 0.0
        %1843 = vmatpush1.msra.mxu0 0.0
        %1844 = vmatprep.subr.mxu0 0.0
        %1845 = vmatpush1.msra.mxu0 0.0
        %1846 = vmatprep.subr.mxu0 0.0
        %1847 = vmatpush1.msra.mxu0 0.0
        %1848 = vmatprep.subr.mxu0 0.0
        %1849 = vmatpush1.msra.mxu0 0.0
        %1850 = vmatprep.subr.mxu0 0.0
        %1851 = vmatpush1.msra.mxu0 0.0
        %1852 = vmatprep.subr.mxu0 0.0
        %1853 = vmatpush1.msra.mxu0 0.0
        %1854 = vmatprep.subr.mxu0 0.0
        %1855 = vmatpush1.msra.mxu0 0.0
        %1856 = vmatprep.subr.mxu0 0.0
        %1857 = vmatpush1.msra.mxu0 0.0
        %1858 = vmatprep.subr.mxu0 0.0
        %1859 = vmatpush1.msra.mxu0 0.0
        %1860 = vmatprep.subr.mxu0 0.0
        %1861 = vmatpush1.msra.mxu0 0.0
        %1862 = vmatprep.subr.mxu0 0.0
        %1863 = vmatpush1.msra.mxu0 0.0
        %1864 = vmatprep.subr.mxu0 0.0
        %1865 = vmatpush1.msra.mxu0 0.0
        %1866 = vmatprep.subr.mxu0 0.0
        %1867 = vmatpush1.msra.mxu0 0.0
        %1868 = vmatprep.subr.mxu0 0.0
        %1869 = vmatpush1.msra.mxu0 0.0
        %1870 = vmatprep.subr.mxu0 0.0
        %1871 = vmatpush1.msra.mxu0 %v314
        %1872 = vmatprep.subr.mxu0 0.0
        %1873 = vmatpush1.msra.mxu0 %v313
        %1874 = vmatprep.subr.mxu0 0.0
        %1875 = vmatpush2.msra.mxu0 0.0
        %1876 = vmatprep.subr.mxu0 0.0
        %1877 = vmatpush2.msra.mxu0 0.0
        %1878 = vmatprep.subr.mxu0 0.0
        %1879 = vmatpush2.msra.mxu0 0.0
        %1880 = vmatprep.subr.mxu0 0.0
        %1881 = vmatpush2.msra.mxu0 0.0
        %1882 = vmatprep.subr.mxu0 0.0
        %1883 = vmatpush2.msra.mxu0 0.0
        %1884 = vmatprep.subr.mxu0 0.0
        %1885 = vmatpush2.msra.mxu0 0.0
        %1886 = vmatprep.subr.mxu0 0.0
        %1887 = vmatpush2.msra.mxu0 0.0
        %1888 = vmatprep.subr.mxu0 0.0
        %1889 = vmatpush2.msra.mxu0 0.0
        %1890 = vmatprep.subr.mxu0 0.0
        %1891 = vmatpush2.msra.mxu0 0.0
        %1892 = vmatprep.subr.mxu0 0.0
        %1893 = vmatpush2.msra.mxu0 0.0
        %1894 = vmatprep.subr.mxu0 0.0
        %1895 = vmatpush2.msra.mxu0 0.0
        %1896 = vmatprep.subr.mxu0 0.0
        %1897 = vmatpush2.msra.mxu0 0.0
        %1898 = vmatprep.subr.mxu0 0.0
        %1899 = vmatpush2.msra.mxu0 0.0
        %1900 = vmatprep.subr.mxu0 0.0
        %1901 = vmatpush2.msra.mxu0 0.0
        %1902 = vmatprep.subr.mxu0 0.0
        %1903 = vmatpush2.msra.mxu0 0.0
        %1904 = vmatprep.subr.mxu0 0.0
        %1905 = vmatpush2.msra.mxu0 0.0
        %1906 = vmatprep.mubr.f32.mxu0 0.0
        %1907 = vmatmul.mubr.f32.gmra.mxu0 %v1837
        %v1908 = vpop.f32.mrf.mxu0
        %v1909 = vadd.f32 0.0, %v1908
        %v1910 = vpop.f32.mrf.mxu0
        %1911 = vmatprep.mubr.f32.mxu0 0.0
        %1912 = vmatmul.mubr.f32.gmra.mxu0 %v1840
        %v1913 = vpop.f32.mrf.mxu0
        %v1914 = vadd.f32 0.0, %v1913
        %v1915 = vpop.f32.mrf.mxu0
        %1916 = vdwg.mxu0
        %v1918 = vsel %vm1641, %v1633, 0
        %v1921 = vsel %vm1641, %v1638, 0
        %1923 = vmatprep.subr.mxu0 0.0
        %1924 = vmatpush1.msra.mxu0 0.0
        %1925 = vmatprep.subr.mxu0 0.0
        %1926 = vmatpush1.msra.mxu0 0.0
        %1927 = vmatprep.subr.mxu0 0.0
        %1928 = vmatpush1.msra.mxu0 0.0
        %1929 = vmatprep.subr.mxu0 0.0
        %1930 = vmatpush1.msra.mxu0 0.0
        %1931 = vmatprep.subr.mxu0 0.0
        %1932 = vmatpush1.msra.mxu0 0.0
        %1933 = vmatprep.subr.mxu0 0.0
        %1934 = vmatpush1.msra.mxu0 0.0
        %1935 = vmatprep.subr.mxu0 0.0
        %1936 = vmatpush1.msra.mxu0 0.0
        %1937 = vmatprep.subr.mxu0 0.0
        %1938 = vmatpush1.msra.mxu0 0.0
        %1939 = vmatprep.subr.mxu0 0.0
        %1940 = vmatpush1.msra.mxu0 0.0
        %1941 = vmatprep.subr.mxu0 0.0
        %1942 = vmatpush1.msra.mxu0 0.0
        %1943 = vmatprep.subr.mxu0 0.0
        %1944 = vmatpush1.msra.mxu0 0.0
        %1945 = vmatprep.subr.mxu0 0.0
        %1946 = vmatpush1.msra.mxu0 0.0
        %1947 = vmatprep.subr.mxu0 0.0
        %1948 = vmatpush1.msra.mxu0 0.0
        %1949 = vmatprep.subr.mxu0 0.0
        %1950 = vmatpush1.msra.mxu0 0.0
        %1951 = vmatprep.subr.mxu0 0.0
        %1952 = vmatpush1.msra.mxu0 %v316
        %1953 = vmatprep.subr.mxu0 0.0
        %1954 = vmatpush1.msra.mxu0 %v315
        %1955 = vmatprep.subr.mxu0 0.0
        %1956 = vmatpush2.msra.mxu0 0.0
        %1957 = vmatprep.subr.mxu0 0.0
        %1958 = vmatpush2.msra.mxu0 0.0
        %1959 = vmatprep.subr.mxu0 0.0
        %1960 = vmatpush2.msra.mxu0 0.0
        %1961 = vmatprep.subr.mxu0 0.0
        %1962 = vmatpush2.msra.mxu0 0.0
        %1963 = vmatprep.subr.mxu0 0.0
        %1964 = vmatpush2.msra.mxu0 0.0
        %1965 = vmatprep.subr.mxu0 0.0
        %1966 = vmatpush2.msra.mxu0 0.0
        %1967 = vmatprep.subr.mxu0 0.0
        %1968 = vmatpush2.msra.mxu0 0.0
        %1969 = vmatprep.subr.mxu0 0.0
        %1970 = vmatpush2.msra.mxu0 0.0
        %1971 = vmatprep.subr.mxu0 0.0
        %1972 = vmatpush2.msra.mxu0 0.0
        %1973 = vmatprep.subr.mxu0 0.0
        %1974 = vmatpush2.msra.mxu0 0.0
        %1975 = vmatprep.subr.mxu0 0.0
        %1976 = vmatpush2.msra.mxu0 0.0
        %1977 = vmatprep.subr.mxu0 0.0
        %1978 = vmatpush2.msra.mxu0 0.0
        %1979 = vmatprep.subr.mxu0 0.0
        %1980 = vmatpush2.msra.mxu0 0.0
        %1981 = vmatprep.subr.mxu0 0.0
        %1982 = vmatpush2.msra.mxu0 0.0
        %1983 = vmatprep.subr.mxu0 0.0
        %1984 = vmatpush2.msra.mxu0 0.0
        %1985 = vmatprep.subr.mxu0 0.0
        %1986 = vmatpush2.msra.mxu0 0.0
        %1987 = vmatprep.mubr.f32.mxu0 0.0
        %1988 = vmatmul.mubr.f32.gmra.mxu0 %v1918
        %v1989 = vpop.f32.mrf.mxu0
        %v1990 = vadd.f32 0.0, %v1989
        %v1991 = vpop.f32.mrf.mxu0
        %1992 = vmatprep.mubr.f32.mxu0 0.0
        %1993 = vmatmul.mubr.f32.gmra.mxu0 %v1921
        %v1994 = vpop.f32.mrf.mxu0
        %v1995 = vadd.f32 0.0, %v1994
        %v1996 = vpop.f32.mrf.mxu0
        %1997 = vdwg.mxu0
        %v1998 = vrcp.pop %v1666
        %v1999 = vmul.f32 1.0, %v1998
        %v2000 = vrcp.pop %v1667
        %v2001 = vmul.f32 1.0, %v2000
        %v2002 = vrcp.pop %v1668
        %v2003 = vmul.f32 1.0, %v2002
        %v2004 = vrcp.pop %v1669
        %v2005 = vmul.f32 1.0, %v2004
        %v2006 = vrcp.pop %v1670
        %v2007 = vmul.f32 1.0, %v2006
        %v2008 = vrcp.pop %v1671
        %v2009 = vmul.f32 1.0, %v2008
        %v2010 = vrcp.pop %v1672
        %v2011 = vmul.f32 1.0, %v2010
        %v2012 = vrcp.pop %v1673
        %v2013 = vmul.f32 1.0, %v2012
        %v2014 = vmul.f32 %v1747, %v1999
        %v2015 = vmul.f32 %v1752, %v2001
        %v2016 = vmul.f32 %v1828, %v2003
        %v2017 = vmul.f32 %v1833, %v2005
        %v2018 = vmul.f32 %v1909, %v2007
        %v2019 = vmul.f32 %v1914, %v2009
        %v2020 = vmul.f32 %v1990, %v2011
        %v2021 = vmul.f32 %v1995, %v2013
        %2022 = vst [vmem:[%s283] sm:$0xff] %v2014
        %2023 = vst [vmem:[%s283 + $0x8] sm:$0xff] %v2015
        %2024 = vst [vmem:[%s283 + $0x10] sm:$0xff] %v2016
        %2025 = vst [vmem:[%s283 + $0x18] sm:$0xff] %v2017
        %2026 = vst [vmem:[%s283 + $0x20] sm:$0xff] %v2018
        %2027 = vst [vmem:[%s283 + $0x28] sm:$0xff] %v2019
        %2028 = vst [vmem:[%s283 + $0x30] sm:$0xff] %v2020
        %2029 = vst [vmem:[%s283 + $0x38] sm:$0xff] %v2021
        %s2030 = sand.u32 %s98, 1
        %s2031 = scalar_lea.sflag [#allocation4], %s2030
        %s2032 = sand.u32 %s98, 1
        %s2033 = smul.addr %s2032, 64
        %s2034 = scalar_lea.vmem [#allocation3], %s2033
        // Predicated region
        $region71: #{fast_attention.1} parent=65 // pred_check
          %p2035 = pneg %p108
        $region72: #{fast_attention.1} parent=65 // pred_check_branch
          %2037 = sbr.rel (%p2035) target = $region74
        $region73: #{fast_attention.1} parent=65 // pred_region
          %s2038 = smul.u32 4, %s17
          %s2040 = ssub.s32 1024, 1024
          %2041 = vsyncadd %s2031, %s2040
          %s2042 = smul.addr %s2038, 2
          %s2043 = smul.addr %s2042, 128
          %s2044 = scalar_lea.hbm %s3, %s2043
          %s2045 = sshll.u32 %s2034, 4
          %s2046 = int_to_ptr.vmem [resolvable:$true] %s2045
          %2051 = dma.vmem_to_hbm [thread:$0]  %s2046, 1024, %s2044, %s2031, 128, 128, 8
        $region74: #{fast_attention.1} parent=65 // pred_fallthru
          _
      $region66: #{fast_attention.1} parent=5 // pred_fallthru
        _
      %p2052 = scmp.le.s32.totalorder 2, %s12
      // Predicated region
      $region75: #{fast_attention.1} parent=5 // pred_check
        %p2053 = pneg %p2052
      $region76: #{fast_attention.1} parent=5 // pred_check_branch
        %2055 = sbr.rel (%p2053) target = $region78
      $region77: #{fast_attention.1} parent=5 // pred_region
        %s2056 = ssub.s32 %s12, 2
        // Predicated region
        $region79: #{fast_attention.1} parent=77 // pred_check
          %p2057 = pneg %p114
        $region80: #{fast_attention.1} parent=77 // pred_check_branch
          %2059 = sbr.rel (%p2057) target = $region82
        $region81: #{fast_attention.1} parent=77 // pred_region
          %s2060 = sand.u32 %s99, 1
          %s2061 = scalar_lea.sflag [#allocation4], %s2060
          %s2062 = sand.u32 %s99, 1
          %s2063 = smul.addr %s2062, 64
          %s2064 = scalar_lea.vmem [#allocation3], %s2063
          %2065 = dma.done %s2061, 1024
        $region82: #{fast_attention.1} parent=77 // pred_fallthru
          _
      $region78: #{fast_attention.1} parent=5 // pred_fallthru
        _
    $region6: #{fast_attention.1} parent=1 // loop_footer
      %s16 = sadd.s32 1, %s12
    $region7: #{fast_attention.1} parent=1 // loop_footer_branch
      %11 = sbr.rel target = $region3
    $region8: #{fast_attention.1} parent=1 // loop_exit
      _
    %2066 = vsyncpa [#allocation4], 1
    %s2067 = scalar_lea.sflag [#allocation4], 1
    %2068 = vsyncpa %s2067, 1

</llo_original>
